<compile_context>
chip_gen: v7x
topology: tpu7x:2x2x1
jax: 0.10.0
libtpu: 0.0.40
codegen_flags: <defaults>
</compile_context>

<pallas_src>
import math
import functools

import jax
import jax.numpy as jnp
from jax.experimental import pallas as pl
from jax.experimental.pallas import tpu as pltpu

HEADS = 8
LEAKY_SLOPE = 0.01  # PyTorch LeakyReLU default negative_slope


def _coattention_kernel(src_ref, tgt_ref,
                        wq_ref, bq_ref,
                        wk_ref, bk_ref,
                        wv_ref, bv_ref,
                        wm_ref, bm_ref,
                        out_ref, att_ref,
                        *, tb, k, hid_dim, heads, d_head):
    rows = tb * k
    scale = 1.0 / math.sqrt(d_head)

    src = src_ref[...].astype(jnp.bfloat16)   # [rows, in_p]
    tgt = tgt_ref[...].astype(jnp.bfloat16)   # [rows, in_p]

    # Projections. Weights are pre-transposed ([in_p, hid]) -> no in-kernel .T.
    # bf16 MXU operands with f32 accumulation; bias / softmax math stays f32.
    q = jnp.dot(tgt, wq_ref[...], preferred_element_type=jnp.float32) + bq_ref[...]
    q = q * scale  # fold 1/sqrt(d_head) into q once (covers q.k / sqrt(d))
    kk = jnp.dot(src, wk_ref[...], preferred_element_type=jnp.float32) + bk_ref[...]
    vv = jnp.dot(src, wv_ref[...], preferred_element_type=jnp.float32) + bv_ref[...]

    # Cast to bf16 ONCE (not per head slice); [rows, hid] -> [tb, k, hid] is a
    # leading-dim split only (no lane relayout).
    q3 = q.astype(jnp.bfloat16).reshape(tb, k, hid_dim)
    k3 = kk.astype(jnp.bfloat16).reshape(tb, k, hid_dim)
    v3 = vv.astype(jnp.bfloat16).reshape(tb, k, hid_dim)

    # Per-head attention; each head's output lands in the [rows, hid] scratch at
    # its column slot so the merge is a single hid_dim-deep matmul afterwards.
    # TODO(synk): head boundaries are not lane-tile (128) aligned when
    # d_head < 128; pad d_head / move heads to a leading dim if relayout copies
    # show up in the bundle dumps.
    # TODO(synk): for very long k, tile the key dim flash-style (running
    # max/sum) instead of the full [k, k] score tile (matters first on v7x's
    # 64 MiB VMEM).
    for h in range(heads):
        lo = h * d_head
        q_h = q3[:, :, lo:lo + d_head]                       # [tb, k, d]
        k_h = k3[:, :, lo:lo + d_head]
        v_h = v3[:, :, lo:lo + d_head]

        s = jnp.einsum("bqd,bkd->bqk", q_h, k_h,
                       preferred_element_type=jnp.float32)   # [tb, k, k]
        s = s - jnp.max(s, axis=-1, keepdims=True)
        e = jnp.exp(s)
        denom = jnp.sum(e, axis=-1, keepdims=True)           # [tb, k, 1]

        # Normalize AFTER the PV matmul: scale the small [tb,k,d] output instead
        # of the [tb,k,k] probability tile (saves VALU work + a [k,k] cast).
        o_h = jnp.einsum("bqk,bkd->bqd", e.astype(jnp.bfloat16), v_h,
                         preferred_element_type=jnp.float32) # un-normalized PV
        o_h = o_h * pl.reciprocal(denom, approx=True)        # EUP divide
        att_ref[:, lo:lo + d_head] = o_h.reshape(rows, d_head).astype(jnp.bfloat16)

    # Single merge matmul: contraction depth = hid_dim (fills the MXU) instead
    # of 8 skinny d_head-deep matmuls accumulating into a live f32 value.
    merged = jnp.dot(att_ref[...], wm_ref[...],
                     preferred_element_type=jnp.float32) + bm_ref[...]
    merged = jnp.where(merged > 0, merged, LEAKY_SLOPE * merged)  # LeakyReLU (f32)
    out_ref[...] = merged.astype(out_ref.dtype)


def _round_up(x, m):
    return ((x + m - 1) // m) * m


def _pick_tb(batch, k, target_rows=512):
    """Batch elements per grid step.

    Constraints: tb divides batch; rows = tb*k is a multiple of 8 (or covers the
    full batch*k).  Prefer grid >= 2 so the single 'parallel' grid axis can
    shard across v7x's two TensorCores, then the largest rows <= target_rows
    (bigger blocks amortize the ~0.35us/step pipeline overhead and fill the
    MXU M dimension; use target_rows ~512-1024 on v6e, smaller on v7x).
    """
    cands = [t for t in range(1, batch + 1)
             if batch % t == 0 and ((t * k) % 8 == 0 or t == batch)]
    multi = [t for t in cands if batch // t >= 2]
    if multi:
        cands = multi
    fits = [t for t in cands if t * k <= target_rows]
    return fits[-1] if fits else cands[0]


def _vmem_limit_bytes():
    # Raise the scoped-VMEM budget above the 16-32 MiB default, but stay well
    # below physical capacity (128 MiB on v5e/v6e, only 64 MiB per TC on v7x).
    limit = 64 * 1024 * 1024
    try:
        cap = pltpu.get_tpu_info().vmem_capacity_bytes
        limit = min(limit, int(cap) * 3 // 4)
    except Exception:
        pass
    return limit


def co_attention(source, target, params, *, heads=HEADS, block_batch=None,
                 target_rows=512):
    """source, target: [batch, k, in_dim] float32.  Returns [batch, k, in_dim]."""
    B, K, in_dim = source.shape
    wq, bq, wk, bk, wv, bv, wm, bm = (params[n] for n in
        ("wq", "bq", "wk", "bk", "wv", "bv", "wm", "bm"))
    hid_dim = wq.shape[0]
    assert hid_dim % heads == 0
    d_head = hid_dim // heads

    tb = block_batch or _pick_tb(B, K, target_rows=target_rows)
    assert B % tb == 0
    rows = tb * K

    # Lane-dense padding of the feature dim (unmasked loads/stores when
    # in_dim < 128 or not a multiple of 128).  Padded columns are zero and are
    # sliced off after the call.
    in_p = _round_up(in_dim, 128)
    pad_in = in_p - in_dim

    # One-time wrapper-side weight plumbing (layout, padding, bf16).
    # NOTE: if the PyTorch FCNet layers use weight-norm, fold g*w/||w|| into
    # wq/wk/wv/wm before calling this wrapper.
    def pad_in_rows(w_t):   # [in_dim, out] -> [in_p, out]
        return jnp.pad(w_t, ((0, pad_in), (0, 0)))

    wq_t = pad_in_rows(wq.T).astype(jnp.bfloat16)                    # [in_p, hid]
    wk_t = pad_in_rows(wk.T).astype(jnp.bfloat16)                    # [in_p, hid]
    wv_t = pad_in_rows(wv.T).astype(jnp.bfloat16)                    # [in_p, hid]
    wm_t = jnp.pad(wm.T, ((0, 0), (0, pad_in))).astype(jnp.bfloat16) # [hid, in_p]
    bq2 = bq.reshape(1, hid_dim).astype(jnp.float32)
    bk2 = bk.reshape(1, hid_dim).astype(jnp.float32)
    bv2 = bv.reshape(1, hid_dim).astype(jnp.float32)
    bm2 = jnp.pad(bm, (0, pad_in)).reshape(1, in_p).astype(jnp.float32)

    src2 = jnp.pad(source.reshape(B * K, in_dim), ((0, 0), (0, pad_in)))
    tgt2 = jnp.pad(target.reshape(B * K, in_dim), ((0, 0), (0, pad_in)))

    kernel = functools.partial(_coattention_kernel, tb=tb, k=K,
                               hid_dim=hid_dim, heads=heads, d_head=d_head)

    def full(shape):
        # Grid-invariant weights/biases (index_map constant -> fetched once).
        # TODO(synk): single-buffer these via pipeline_mode=pl.Buffered(1) to
        # halve their VMEM footprint once that path is exercised in CI.
        return pl.BlockSpec(shape, lambda b: (0,) * len(shape))

    out = pl.pallas_call(
        kernel,
        out_shape=jax.ShapeDtypeStruct((B * K, in_p), source.dtype),
        grid_spec=pltpu.PrefetchScalarGridSpec(
            num_scalar_prefetch=0,
            grid=(B // tb,),
            in_specs=[
                pl.BlockSpec((rows, in_p), lambda b: (b, 0)),  # source rows
                pl.BlockSpec((rows, in_p), lambda b: (b, 0)),  # target rows
                full(wq_t.shape), full(bq2.shape),
                full(wk_t.shape), full(bk2.shape),
                full(wv_t.shape), full(bv2.shape),
                full(wm_t.shape), full(bm2.shape),
            ],
            out_specs=pl.BlockSpec((rows, in_p), lambda b: (b, 0)),
            scratch_shapes=[pltpu.VMEM((rows, hid_dim), jnp.bfloat16)],
        ),
        compiler_params=pltpu.CompilerParams(
            dimension_semantics=("parallel",),
            vmem_limit_bytes=_vmem_limit_bytes(),
        ),
    )(src2, tgt2, wq_t, bq2, wk_t, bk2, wv_t, bv2, wm_t, bm2)

    return out[:, :in_dim].reshape(B, K, in_dim)


def init_params(key, in_dim, hid_dim):
    """Deterministic synthetic parameters (PyTorch nn.Linear layout [out, in])."""
    ks = jax.random.split(key, 8)
    def lin(kw, kb, out_d, in_d):
        bound = 1.0 / math.sqrt(in_d)
        w = jax.random.uniform(kw, (out_d, in_d), jnp.float32, -bound, bound)
        b = jax.random.uniform(kb, (out_d,), jnp.float32, -bound, bound)
        return w, b
    wq, bq = lin(ks[0], ks[1], hid_dim, in_dim)
    wk, bk = lin(ks[2], ks[3], hid_dim, in_dim)
    wv, bv = lin(ks[4], ks[5], hid_dim, in_dim)
    wm, bm = lin(ks[6], ks[7], in_dim, hid_dim)
    return dict(wq=wq, bq=bq, wk=wk, bk=bk, wv=wv, bv=bv, wm=wm, bm=bm)


def _reference(source, target, p, heads=HEADS):
    """Pure-JAX f32 reference mirroring the PyTorch forward."""
    B, K, in_dim = source.shape
    hid = p["wq"].shape[0]
    d = hid // heads
    q = target @ p["wq"].T + p["bq"]
    k_ = source @ p["wk"].T + p["bk"]
    v = source @ p["wv"].T + p["bv"]
    def split(x):  # [B,K,hid] -> [B,H,K,d]
        return x.reshape(B, K, heads, d).transpose(0, 2, 1, 3)
    qh, kh, vh = split(q), split(k_), split(v)
    scores = jnp.einsum("bhqd,bhkd->bhqk", qh, kh) / math.sqrt(d)
    att = jax.nn.softmax(scores, axis=-1)
    out = jnp.einsum("bhqk,bhkd->bhqd", att, vh)
    out = out.transpose(0, 2, 1, 3).reshape(B, K, hid)
    merged = out @ p["wm"].T + p["bm"]
    return jnp.where(merged > 0, merged, LEAKY_SLOPE * merged)


if __name__ == "__main__":
    B, K, IN_DIM, HID_DIM = 2, 8, 16, 32   # hid_dim divisible by 8 heads
    key = jax.random.PRNGKey(0)
    k_src, k_tgt, k_par = jax.random.split(key, 3)
    source = jax.random.normal(k_src, (B, K, IN_DIM), jnp.float32)
    target = jax.random.normal(k_tgt, (B, K, IN_DIM), jnp.float32)
    params = init_params(k_par, IN_DIM, HID_DIM)

    out = co_attention(source, target, params)
    out = jax.block_until_ready(out)

    ref = _reference(source, target, params)
    assert out.shape == (B, K, IN_DIM)
    # bf16 matmul inputs (f32 accumulation) + approx reciprocal -> bf16-level tol.
    assert jnp.allclose(out, ref, atol=5e-2, rtol=5e-2), "mismatch vs reference"

    # TODO(synk): dropout in FCNet is omitted (identity in eval mode).
    print("KERNEL_OK")
</pallas_src>

<mosaic_0001>
module attributes {stable_mosaic.version = 11 : i64} {
  func.func @_coattention_kernel(%arg0: i32, %arg1: memref<8x128xf32, #tpu.memory_space<vmem>>, %arg2: memref<8x128xf32, #tpu.memory_space<vmem>>, %arg3: memref<128x32xbf16, #tpu.memory_space<vmem>>, %arg4: memref<1x32xf32, #tpu.memory_space<vmem>>, %arg5: memref<128x32xbf16, #tpu.memory_space<vmem>>, %arg6: memref<1x32xf32, #tpu.memory_space<vmem>>, %arg7: memref<128x32xbf16, #tpu.memory_space<vmem>>, %arg8: memref<1x32xf32, #tpu.memory_space<vmem>>, %arg9: memref<32x128xbf16, #tpu.memory_space<vmem>>, %arg10: memref<1x128xf32, #tpu.memory_space<vmem>>, %arg11: memref<8x128xf32, #tpu.memory_space<vmem>>, %arg12: memref<8x32xbf16, #tpu.memory_space<vmem>>) attributes {dimension_semantics = [#tpu.dimension_semantics<parallel>], iteration_bounds = array<i64: 2>, scalar_prefetch = 0 : i64, scratch_operands = 1 : i64, tpu.core_type = #tpu.core_type<tc>, window_params = [{transform_indices = @transform_0, window_bounds = array<i64: 8, 128>}, {transform_indices = @transform_1, window_bounds = array<i64: 8, 128>}, {pipeline_mode = #tpu.pipeline_mode<synchronous>, transform_indices = @transform_2, window_bounds = array<i64: 128, 32>}, {pipeline_mode = #tpu.pipeline_mode<synchronous>, transform_indices = @transform_3, window_bounds = array<i64: 1, 32>}, {pipeline_mode = #tpu.pipeline_mode<synchronous>, transform_indices = @transform_4, window_bounds = array<i64: 128, 32>}, {pipeline_mode = #tpu.pipeline_mode<synchronous>, transform_indices = @transform_5, window_bounds = array<i64: 1, 32>}, {pipeline_mode = #tpu.pipeline_mode<synchronous>, transform_indices = @transform_6, window_bounds = array<i64: 128, 32>}, {pipeline_mode = #tpu.pipeline_mode<synchronous>, transform_indices = @transform_7, window_bounds = array<i64: 1, 32>}, {pipeline_mode = #tpu.pipeline_mode<synchronous>, transform_indices = @transform_8, window_bounds = array<i64: 32, 128>}, {pipeline_mode = #tpu.pipeline_mode<synchronous>, transform_indices = @transform_9, window_bounds = array<i64: 1, 128>}, {transform_indices = @transform_10, window_bounds = array<i64: 8, 128>}]} {
    %c0 = arith.constant 0 : index
    %c0_0 = arith.constant 0 : index
    %0 = vector.load %arg1[%c0, %c0_0] : memref<8x128xf32, #tpu.memory_space<vmem>>, vector<8x128xf32>
    %1 = arith.truncf %0 : vector<8x128xf32> to vector<8x128xbf16>
    %c0_1 = arith.constant 0 : index
    %c0_2 = arith.constant 0 : index
    %2 = vector.load %arg2[%c0_1, %c0_2] : memref<8x128xf32, #tpu.memory_space<vmem>>, vector<8x128xf32>
    %3 = arith.truncf %2 : vector<8x128xf32> to vector<8x128xbf16>
    %c0_3 = arith.constant 0 : index
    %c0_4 = arith.constant 0 : index
    %4 = vector.load %arg3[%c0_3, %c0_4] : memref<128x32xbf16, #tpu.memory_space<vmem>>, vector<128x32xbf16>
    %cst = arith.constant dense<0.000000e+00> : vector<8x32xf32>
    %5 = tpu.matmul %3, %4, %cst {dimension_numbers = #tpu.dot_dimension_numbers<[1], [0], [0], [1], [0, 0, 1, 1], [], []>} : vector<8x128xbf16>, vector<128x32xbf16>, vector<8x32xf32> -> vector<8x32xf32>
    %c0_5 = arith.constant 0 : index
    %c0_6 = arith.constant 0 : index
    %6 = vector.load %arg4[%c0_5, %c0_6] : memref<1x32xf32, #tpu.memory_space<vmem>>, vector<1x32xf32>
    %7 = vector.broadcast %6 : vector<1x32xf32> to vector<8x32xf32>
    %8 = arith.addf %5, %7 : vector<8x32xf32>
    %cst_7 = arith.constant 5.000000e-01 : f32
    %9 = vector.broadcast %cst_7 : f32 to vector<8x32xf32>
    %10 = arith.mulf %8, %9 : vector<8x32xf32>
    %c0_8 = arith.constant 0 : index
    %c0_9 = arith.constant 0 : index
    %11 = vector.load %arg5[%c0_8, %c0_9] : memref<128x32xbf16, #tpu.memory_space<vmem>>, vector<128x32xbf16>
    %cst_10 = arith.constant dense<0.000000e+00> : vector<8x32xf32>
    %12 = tpu.matmul %1, %11, %cst_10 {dimension_numbers = #tpu.dot_dimension_numbers<[1], [0], [0], [1], [0, 0, 1, 1], [], []>} : vector<8x128xbf16>, vector<128x32xbf16>, vector<8x32xf32> -> vector<8x32xf32>
    %c0_11 = arith.constant 0 : index
    %c0_12 = arith.constant 0 : index
    %13 = vector.load %arg6[%c0_11, %c0_12] : memref<1x32xf32, #tpu.memory_space<vmem>>, vector<1x32xf32>
    %14 = vector.broadcast %13 : vector<1x32xf32> to vector<8x32xf32>
    %15 = arith.addf %12, %14 : vector<8x32xf32>
    %c0_13 = arith.constant 0 : index
    %c0_14 = arith.constant 0 : index
    %16 = vector.load %arg7[%c0_13, %c0_14] : memref<128x32xbf16, #tpu.memory_space<vmem>>, vector<128x32xbf16>
    %cst_15 = arith.constant dense<0.000000e+00> : vector<8x32xf32>
    %17 = tpu.matmul %1, %16, %cst_15 {dimension_numbers = #tpu.dot_dimension_numbers<[1], [0], [0], [1], [0, 0, 1, 1], [], []>} : vector<8x128xbf16>, vector<128x32xbf16>, vector<8x32xf32> -> vector<8x32xf32>
    %c0_16 = arith.constant 0 : index
    %c0_17 = arith.constant 0 : index
    %18 = vector.load %arg8[%c0_16, %c0_17] : memref<1x32xf32, #tpu.memory_space<vmem>>, vector<1x32xf32>
    %19 = vector.broadcast %18 : vector<1x32xf32> to vector<8x32xf32>
    %20 = arith.addf %17, %19 : vector<8x32xf32>
    %21 = arith.truncf %10 : vector<8x32xf32> to vector<8x32xbf16>
    %22 = vector.shape_cast %21 : vector<8x32xbf16> to vector<1x8x32xbf16>
    %23 = arith.truncf %15 : vector<8x32xf32> to vector<8x32xbf16>
    %24 = vector.shape_cast %23 : vector<8x32xbf16> to vector<1x8x32xbf16>
    %25 = arith.truncf %20 : vector<8x32xf32> to vector<8x32xbf16>
    %26 = vector.shape_cast %25 : vector<8x32xbf16> to vector<1x8x32xbf16>
    %27 = vector.extract_strided_slice %22 {offsets = [0, 0, 0], sizes = [1, 8, 4], strides = [1, 1, 1]} : vector<1x8x32xbf16> to vector<1x8x4xbf16>
    %28 = vector.extract_strided_slice %24 {offsets = [0, 0, 0], sizes = [1, 8, 4], strides = [1, 1, 1]} : vector<1x8x32xbf16> to vector<1x8x4xbf16>
    %29 = vector.extract_strided_slice %26 {offsets = [0, 0, 0], sizes = [1, 8, 4], strides = [1, 1, 1]} : vector<1x8x32xbf16> to vector<1x8x4xbf16>
    "tpu.trace_start"() <{level = 10 : i32, message = "bqd,bkd->bqk"}> : () -> ()
    %cst_18 = arith.constant dense<0.000000e+00> : vector<1x8x8xf32>
    %30 = tpu.matmul %27, %28, %cst_18 {dimension_numbers = #tpu.dot_dimension_numbers<[2], [2], [1], [1], [0, 0, 0, 1, 1, 1], [0], [0]>} : vector<1x8x4xbf16>, vector<1x8x4xbf16>, vector<1x8x8xf32> -> vector<1x8x8xf32>
    "tpu.trace_stop"() : () -> ()
    %cst_19 = arith.constant dense<0xFF800000> : vector<1x8xf32>
    %31 = vector.multi_reduction <maximumf>, %30, %cst_19 [2] : vector<1x8x8xf32> to vector<1x8xf32>
    %32 = vector.shape_cast %31 : vector<1x8xf32> to vector<1x8x1xf32>
    %33 = vector.broadcast %32 : vector<1x8x1xf32> to vector<1x8x8xf32>
    %34 = arith.subf %30, %33 : vector<1x8x8xf32>
    %35 = math.exp %34 : vector<1x8x8xf32>
    %cst_20 = arith.constant dense<0.000000e+00> : vector<1x8xf32>
    %36 = vector.multi_reduction <add>, %35, %cst_20 [2] : vector<1x8x8xf32> to vector<1x8xf32>
    %37 = vector.shape_cast %36 : vector<1x8xf32> to vector<1x8x1xf32>
    %38 = arith.truncf %35 : vector<1x8x8xf32> to vector<1x8x8xbf16>
    "tpu.trace_start"() <{level = 10 : i32, message = "bqk,bkd->bqd"}> : () -> ()
    %cst_21 = arith.constant dense<0.000000e+00> : vector<1x8x4xf32>
    %39 = tpu.matmul %38, %29, %cst_21 {dimension_numbers = #tpu.dot_dimension_numbers<[2], [1], [1], [2], [0, 0, 0, 1, 1, 2], [0], [0]>} : vector<1x8x8xbf16>, vector<1x8x4xbf16>, vector<1x8x4xf32> -> vector<1x8x4xf32>
    "tpu.trace_stop"() : () -> ()
    %40 = tpu.reciprocal %37 {approx = true} : vector<1x8x1xf32> -> vector<1x8x1xf32>
    %41 = vector.broadcast %40 : vector<1x8x1xf32> to vector<1x8x4xf32>
    %42 = arith.mulf %39, %41 : vector<1x8x4xf32>
    %43 = vector.shape_cast %42 : vector<1x8x4xf32> to vector<8x4xf32>
    %44 = arith.truncf %43 : vector<8x4xf32> to vector<8x4xbf16>
    %c0_22 = arith.constant 0 : index
    %c0_23 = arith.constant 0 : index
    %45 = vector.load %arg12[%c0_22, %c0_23] : memref<8x32xbf16, #tpu.memory_space<vmem>>, vector<8x4xbf16>
    tpu.vector_store %arg12[%c0_22, %c0_23], %44 {strides = array<i32>} : memref<8x32xbf16, #tpu.memory_space<vmem>>, vector<8x4xbf16>,
    %46 = vector.extract_strided_slice %22 {offsets = [0, 0, 4], sizes = [1, 8, 4], strides = [1, 1, 1]} : vector<1x8x32xbf16> to vector<1x8x4xbf16>
    %47 = vector.extract_strided_slice %24 {offsets = [0, 0, 4], sizes = [1, 8, 4], strides = [1, 1, 1]} : vector<1x8x32xbf16> to vector<1x8x4xbf16>
    %48 = vector.extract_strided_slice %26 {offsets = [0, 0, 4], sizes = [1, 8, 4], strides = [1, 1, 1]} : vector<1x8x32xbf16> to vector<1x8x4xbf16>
    "tpu.trace_start"() <{level = 10 : i32, message = "bqd,bkd->bqk"}> : () -> ()
    %cst_24 = arith.constant dense<0.000000e+00> : vector<1x8x8xf32>
    %49 = tpu.matmul %46, %47, %cst_24 {dimension_numbers = #tpu.dot_dimension_numbers<[2], [2], [1], [1], [0, 0, 0, 1, 1, 1], [0], [0]>} : vector<1x8x4xbf16>, vector<1x8x4xbf16>, vector<1x8x8xf32> -> vector<1x8x8xf32>
    "tpu.trace_stop"() : () -> ()
    %cst_25 = arith.constant dense<0xFF800000> : vector<1x8xf32>
    %50 = vector.multi_reduction <maximumf>, %49, %cst_25 [2] : vector<1x8x8xf32> to vector<1x8xf32>
    %51 = vector.shape_cast %50 : vector<1x8xf32> to vector<1x8x1xf32>
    %52 = vector.broadcast %51 : vector<1x8x1xf32> to vector<1x8x8xf32>
    %53 = arith.subf %49, %52 : vector<1x8x8xf32>
    %54 = math.exp %53 : vector<1x8x8xf32>
    %cst_26 = arith.constant dense<0.000000e+00> : vector<1x8xf32>
    %55 = vector.multi_reduction <add>, %54, %cst_26 [2] : vector<1x8x8xf32> to vector<1x8xf32>
    %56 = vector.shape_cast %55 : vector<1x8xf32> to vector<1x8x1xf32>
    %57 = arith.truncf %54 : vector<1x8x8xf32> to vector<1x8x8xbf16>
    "tpu.trace_start"() <{level = 10 : i32, message = "bqk,bkd->bqd"}> : () -> ()
    %cst_27 = arith.constant dense<0.000000e+00> : vector<1x8x4xf32>
    %58 = tpu.matmul %57, %48, %cst_27 {dimension_numbers = #tpu.dot_dimension_numbers<[2], [1], [1], [2], [0, 0, 0, 1, 1, 2], [0], [0]>} : vector<1x8x8xbf16>, vector<1x8x4xbf16>, vector<1x8x4xf32> -> vector<1x8x4xf32>
    "tpu.trace_stop"() : () -> ()
    %59 = tpu.reciprocal %56 {approx = true} : vector<1x8x1xf32> -> vector<1x8x1xf32>
    %60 = vector.broadcast %59 : vector<1x8x1xf32> to vector<1x8x4xf32>
    %61 = arith.mulf %58, %60 : vector<1x8x4xf32>
    %62 = vector.shape_cast %61 : vector<1x8x4xf32> to vector<8x4xf32>
    %63 = arith.truncf %62 : vector<8x4xf32> to vector<8x4xbf16>
    %c0_28 = arith.constant 0 : index
    %c4 = arith.constant 4 : index
    %64 = vector.load %arg12[%c0_28, %c4] : memref<8x32xbf16, #tpu.memory_space<vmem>>, vector<8x4xbf16>
    tpu.vector_store %arg12[%c0_28, %c4], %63 {strides = array<i32>} : memref<8x32xbf16, #tpu.memory_space<vmem>>, vector<8x4xbf16>,
    %65 = vector.extract_strided_slice %22 {offsets = [0, 0, 8], sizes = [1, 8, 4], strides = [1, 1, 1]} : vector<1x8x32xbf16> to vector<1x8x4xbf16>
    %66 = vector.extract_strided_slice %24 {offsets = [0, 0, 8], sizes = [1, 8, 4], strides = [1, 1, 1]} : vector<1x8x32xbf16> to vector<1x8x4xbf16>
    %67 = vector.extract_strided_slice %26 {offsets = [0, 0, 8], sizes = [1, 8, 4], strides = [1, 1, 1]} : vector<1x8x32xbf16> to vector<1x8x4xbf16>
    "tpu.trace_start"() <{level = 10 : i32, message = "bqd,bkd->bqk"}> : () -> ()
    %cst_29 = arith.constant dense<0.000000e+00> : vector<1x8x8xf32>
    %68 = tpu.matmul %65, %66, %cst_29 {dimension_numbers = #tpu.dot_dimension_numbers<[2], [2], [1], [1], [0, 0, 0, 1, 1, 1], [0], [0]>} : vector<1x8x4xbf16>, vector<1x8x4xbf16>, vector<1x8x8xf32> -> vector<1x8x8xf32>
    "tpu.trace_stop"() : () -> ()
    %cst_30 = arith.constant dense<0xFF800000> : vector<1x8xf32>
    %69 = vector.multi_reduction <maximumf>, %68, %cst_30 [2] : vector<1x8x8xf32> to vector<1x8xf32>
    %70 = vector.shape_cast %69 : vector<1x8xf32> to vector<1x8x1xf32>
    %71 = vector.broadcast %70 : vector<1x8x1xf32> to vector<1x8x8xf32>
    %72 = arith.subf %68, %71 : vector<1x8x8xf32>
    %73 = math.exp %72 : vector<1x8x8xf32>
    %cst_31 = arith.constant dense<0.000000e+00> : vector<1x8xf32>
    %74 = vector.multi_reduction <add>, %73, %cst_31 [2] : vector<1x8x8xf32> to vector<1x8xf32>
    %75 = vector.shape_cast %74 : vector<1x8xf32> to vector<1x8x1xf32>
    %76 = arith.truncf %73 : vector<1x8x8xf32> to vector<1x8x8xbf16>
    "tpu.trace_start"() <{level = 10 : i32, message = "bqk,bkd->bqd"}> : () -> ()
    %cst_32 = arith.constant dense<0.000000e+00> : vector<1x8x4xf32>
    %77 = tpu.matmul %76, %67, %cst_32 {dimension_numbers = #tpu.dot_dimension_numbers<[2], [1], [1], [2], [0, 0, 0, 1, 1, 2], [0], [0]>} : vector<1x8x8xbf16>, vector<1x8x4xbf16>, vector<1x8x4xf32> -> vector<1x8x4xf32>
    "tpu.trace_stop"() : () -> ()
    %78 = tpu.reciprocal %75 {approx = true} : vector<1x8x1xf32> -> vector<1x8x1xf32>
    %79 = vector.broadcast %78 : vector<1x8x1xf32> to vector<1x8x4xf32>
    %80 = arith.mulf %77, %79 : vector<1x8x4xf32>
    %81 = vector.shape_cast %80 : vector<1x8x4xf32> to vector<8x4xf32>
    %82 = arith.truncf %81 : vector<8x4xf32> to vector<8x4xbf16>
    %c0_33 = arith.constant 0 : index
    %c8 = arith.constant 8 : index
    %83 = vector.load %arg12[%c0_33, %c8] : memref<8x32xbf16, #tpu.memory_space<vmem>>, vector<8x4xbf16>
    tpu.vector_store %arg12[%c0_33, %c8], %82 {strides = array<i32>} : memref<8x32xbf16, #tpu.memory_space<vmem>>, vector<8x4xbf16>,
    %84 = vector.extract_strided_slice %22 {offsets = [0, 0, 12], sizes = [1, 8, 4], strides = [1, 1, 1]} : vector<1x8x32xbf16> to vector<1x8x4xbf16>
    %85 = vector.extract_strided_slice %24 {offsets = [0, 0, 12], sizes = [1, 8, 4], strides = [1, 1, 1]} : vector<1x8x32xbf16> to vector<1x8x4xbf16>
    %86 = vector.extract_strided_slice %26 {offsets = [0, 0, 12], sizes = [1, 8, 4], strides = [1, 1, 1]} : vector<1x8x32xbf16> to vector<1x8x4xbf16>
    "tpu.trace_start"() <{level = 10 : i32, message = "bqd,bkd->bqk"}> : () -> ()
    %cst_34 = arith.constant dense<0.000000e+00> : vector<1x8x8xf32>
    %87 = tpu.matmul %84, %85, %cst_34 {dimension_numbers = #tpu.dot_dimension_numbers<[2], [2], [1], [1], [0, 0, 0, 1, 1, 1], [0], [0]>} : vector<1x8x4xbf16>, vector<1x8x4xbf16>, vector<1x8x8xf32> -> vector<1x8x8xf32>
    "tpu.trace_stop"() : () -> ()
    %cst_35 = arith.constant dense<0xFF800000> : vector<1x8xf32>
    %88 = vector.multi_reduction <maximumf>, %87, %cst_35 [2] : vector<1x8x8xf32> to vector<1x8xf32>
    %89 = vector.shape_cast %88 : vector<1x8xf32> to vector<1x8x1xf32>
    %90 = vector.broadcast %89 : vector<1x8x1xf32> to vector<1x8x8xf32>
    %91 = arith.subf %87, %90 : vector<1x8x8xf32>
    %92 = math.exp %91 : vector<1x8x8xf32>
    %cst_36 = arith.constant dense<0.000000e+00> : vector<1x8xf32>
    %93 = vector.multi_reduction <add>, %92, %cst_36 [2] : vector<1x8x8xf32> to vector<1x8xf32>
    %94 = vector.shape_cast %93 : vector<1x8xf32> to vector<1x8x1xf32>
    %95 = arith.truncf %92 : vector<1x8x8xf32> to vector<1x8x8xbf16>
    "tpu.trace_start"() <{level = 10 : i32, message = "bqk,bkd->bqd"}> : () -> ()
    %cst_37 = arith.constant dense<0.000000e+00> : vector<1x8x4xf32>
    %96 = tpu.matmul %95, %86, %cst_37 {dimension_numbers = #tpu.dot_dimension_numbers<[2], [1], [1], [2], [0, 0, 0, 1, 1, 2], [0], [0]>} : vector<1x8x8xbf16>, vector<1x8x4xbf16>, vector<1x8x4xf32> -> vector<1x8x4xf32>
    "tpu.trace_stop"() : () -> ()
    %97 = tpu.reciprocal %94 {approx = true} : vector<1x8x1xf32> -> vector<1x8x1xf32>
    %98 = vector.broadcast %97 : vector<1x8x1xf32> to vector<1x8x4xf32>
    %99 = arith.mulf %96, %98 : vector<1x8x4xf32>
    %100 = vector.shape_cast %99 : vector<1x8x4xf32> to vector<8x4xf32>
    %101 = arith.truncf %100 : vector<8x4xf32> to vector<8x4xbf16>
    %c0_38 = arith.constant 0 : index
    %c12 = arith.constant 12 : index
    %102 = vector.load %arg12[%c0_38, %c12] : memref<8x32xbf16, #tpu.memory_space<vmem>>, vector<8x4xbf16>
    tpu.vector_store %arg12[%c0_38, %c12], %101 {strides = array<i32>} : memref<8x32xbf16, #tpu.memory_space<vmem>>, vector<8x4xbf16>,
    %103 = vector.extract_strided_slice %22 {offsets = [0, 0, 16], sizes = [1, 8, 4], strides = [1, 1, 1]} : vector<1x8x32xbf16> to vector<1x8x4xbf16>
    %104 = vector.extract_strided_slice %24 {offsets = [0, 0, 16], sizes = [1, 8, 4], strides = [1, 1, 1]} : vector<1x8x32xbf16> to vector<1x8x4xbf16>
    %105 = vector.extract_strided_slice %26 {offsets = [0, 0, 16], sizes = [1, 8, 4], strides = [1, 1, 1]} : vector<1x8x32xbf16> to vector<1x8x4xbf16>
    "tpu.trace_start"() <{level = 10 : i32, message = "bqd,bkd->bqk"}> : () -> ()
    %cst_39 = arith.constant dense<0.000000e+00> : vector<1x8x8xf32>
    %106 = tpu.matmul %103, %104, %cst_39 {dimension_numbers = #tpu.dot_dimension_numbers<[2], [2], [1], [1], [0, 0, 0, 1, 1, 1], [0], [0]>} : vector<1x8x4xbf16>, vector<1x8x4xbf16>, vector<1x8x8xf32> -> vector<1x8x8xf32>
    "tpu.trace_stop"() : () -> ()
    %cst_40 = arith.constant dense<0xFF800000> : vector<1x8xf32>
    %107 = vector.multi_reduction <maximumf>, %106, %cst_40 [2] : vector<1x8x8xf32> to vector<1x8xf32>
    %108 = vector.shape_cast %107 : vector<1x8xf32> to vector<1x8x1xf32>
    %109 = vector.broadcast %108 : vector<1x8x1xf32> to vector<1x8x8xf32>
    %110 = arith.subf %106, %109 : vector<1x8x8xf32>
    %111 = math.exp %110 : vector<1x8x8xf32>
    %cst_41 = arith.constant dense<0.000000e+00> : vector<1x8xf32>
    %112 = vector.multi_reduction <add>, %111, %cst_41 [2] : vector<1x8x8xf32> to vector<1x8xf32>
    %113 = vector.shape_cast %112 : vector<1x8xf32> to vector<1x8x1xf32>
    %114 = arith.truncf %111 : vector<1x8x8xf32> to vector<1x8x8xbf16>
    "tpu.trace_start"() <{level = 10 : i32, message = "bqk,bkd->bqd"}> : () -> ()
    %cst_42 = arith.constant dense<0.000000e+00> : vector<1x8x4xf32>
    %115 = tpu.matmul %114, %105, %cst_42 {dimension_numbers = #tpu.dot_dimension_numbers<[2], [1], [1], [2], [0, 0, 0, 1, 1, 2], [0], [0]>} : vector<1x8x8xbf16>, vector<1x8x4xbf16>, vector<1x8x4xf32> -> vector<1x8x4xf32>
    "tpu.trace_stop"() : () -> ()
    %116 = tpu.reciprocal %113 {approx = true} : vector<1x8x1xf32> -> vector<1x8x1xf32>
    %117 = vector.broadcast %116 : vector<1x8x1xf32> to vector<1x8x4xf32>
    %118 = arith.mulf %115, %117 : vector<1x8x4xf32>
    %119 = vector.shape_cast %118 : vector<1x8x4xf32> to vector<8x4xf32>
    %120 = arith.truncf %119 : vector<8x4xf32> to vector<8x4xbf16>
    %c0_43 = arith.constant 0 : index
    %c16 = arith.constant 16 : index
    %121 = vector.load %arg12[%c0_43, %c16] : memref<8x32xbf16, #tpu.memory_space<vmem>>, vector<8x4xbf16>
    tpu.vector_store %arg12[%c0_43, %c16], %120 {strides = array<i32>} : memref<8x32xbf16, #tpu.memory_space<vmem>>, vector<8x4xbf16>,
    %122 = vector.extract_strided_slice %22 {offsets = [0, 0, 20], sizes = [1, 8, 4], strides = [1, 1, 1]} : vector<1x8x32xbf16> to vector<1x8x4xbf16>
    %123 = vector.extract_strided_slice %24 {offsets = [0, 0, 20], sizes = [1, 8, 4], strides = [1, 1, 1]} : vector<1x8x32xbf16> to vector<1x8x4xbf16>
    %124 = vector.extract_strided_slice %26 {offsets = [0, 0, 20], sizes = [1, 8, 4], strides = [1, 1, 1]} : vector<1x8x32xbf16> to vector<1x8x4xbf16>
    "tpu.trace_start"() <{level = 10 : i32, message = "bqd,bkd->bqk"}> : () -> ()
    %cst_44 = arith.constant dense<0.000000e+00> : vector<1x8x8xf32>
    %125 = tpu.matmul %122, %123, %cst_44 {dimension_numbers = #tpu.dot_dimension_numbers<[2], [2], [1], [1], [0, 0, 0, 1, 1, 1], [0], [0]>} : vector<1x8x4xbf16>, vector<1x8x4xbf16>, vector<1x8x8xf32> -> vector<1x8x8xf32>
    "tpu.trace_stop"() : () -> ()
    %cst_45 = arith.constant dense<0xFF800000> : vector<1x8xf32>
    %126 = vector.multi_reduction <maximumf>, %125, %cst_45 [2] : vector<1x8x8xf32> to vector<1x8xf32>
    %127 = vector.shape_cast %126 : vector<1x8xf32> to vector<1x8x1xf32>
    %128 = vector.broadcast %127 : vector<1x8x1xf32> to vector<1x8x8xf32>
    %129 = arith.subf %125, %128 : vector<1x8x8xf32>
    %130 = math.exp %129 : vector<1x8x8xf32>
    %cst_46 = arith.constant dense<0.000000e+00> : vector<1x8xf32>
    %131 = vector.multi_reduction <add>, %130, %cst_46 [2] : vector<1x8x8xf32> to vector<1x8xf32>
    %132 = vector.shape_cast %131 : vector<1x8xf32> to vector<1x8x1xf32>
    %133 = arith.truncf %130 : vector<1x8x8xf32> to vector<1x8x8xbf16>
    "tpu.trace_start"() <{level = 10 : i32, message = "bqk,bkd->bqd"}> : () -> ()
    %cst_47 = arith.constant dense<0.000000e+00> : vector<1x8x4xf32>
    %134 = tpu.matmul %133, %124, %cst_47 {dimension_numbers = #tpu.dot_dimension_numbers<[2], [1], [1], [2], [0, 0, 0, 1, 1, 2], [0], [0]>} : vector<1x8x8xbf16>, vector<1x8x4xbf16>, vector<1x8x4xf32> -> vector<1x8x4xf32>
    "tpu.trace_stop"() : () -> ()
    %135 = tpu.reciprocal %132 {approx = true} : vector<1x8x1xf32> -> vector<1x8x1xf32>
    %136 = vector.broadcast %135 : vector<1x8x1xf32> to vector<1x8x4xf32>
    %137 = arith.mulf %134, %136 : vector<1x8x4xf32>
    %138 = vector.shape_cast %137 : vector<1x8x4xf32> to vector<8x4xf32>
    %139 = arith.truncf %138 : vector<8x4xf32> to vector<8x4xbf16>
    %c0_48 = arith.constant 0 : index
    %c20 = arith.constant 20 : index
    %140 = vector.load %arg12[%c0_48, %c20] : memref<8x32xbf16, #tpu.memory_space<vmem>>, vector<8x4xbf16>
    tpu.vector_store %arg12[%c0_48, %c20], %139 {strides = array<i32>} : memref<8x32xbf16, #tpu.memory_space<vmem>>, vector<8x4xbf16>,
    %141 = vector.extract_strided_slice %22 {offsets = [0, 0, 24], sizes = [1, 8, 4], strides = [1, 1, 1]} : vector<1x8x32xbf16> to vector<1x8x4xbf16>
    %142 = vector.extract_strided_slice %24 {offsets = [0, 0, 24], sizes = [1, 8, 4], strides = [1, 1, 1]} : vector<1x8x32xbf16> to vector<1x8x4xbf16>
    %143 = vector.extract_strided_slice %26 {offsets = [0, 0, 24], sizes = [1, 8, 4], strides = [1, 1, 1]} : vector<1x8x32xbf16> to vector<1x8x4xbf16>
    "tpu.trace_start"() <{level = 10 : i32, message = "bqd,bkd->bqk"}> : () -> ()
    %cst_49 = arith.constant dense<0.000000e+00> : vector<1x8x8xf32>
    %144 = tpu.matmul %141, %142, %cst_49 {dimension_numbers = #tpu.dot_dimension_numbers<[2], [2], [1], [1], [0, 0, 0, 1, 1, 1], [0], [0]>} : vector<1x8x4xbf16>, vector<1x8x4xbf16>, vector<1x8x8xf32> -> vector<1x8x8xf32>
    "tpu.trace_stop"() : () -> ()
    %cst_50 = arith.constant dense<0xFF800000> : vector<1x8xf32>
    %145 = vector.multi_reduction <maximumf>, %144, %cst_50 [2] : vector<1x8x8xf32> to vector<1x8xf32>
    %146 = vector.shape_cast %145 : vector<1x8xf32> to vector<1x8x1xf32>
    %147 = vector.broadcast %146 : vector<1x8x1xf32> to vector<1x8x8xf32>
    %148 = arith.subf %144, %147 : vector<1x8x8xf32>
    %149 = math.exp %148 : vector<1x8x8xf32>
    %cst_51 = arith.constant dense<0.000000e+00> : vector<1x8xf32>
    %150 = vector.multi_reduction <add>, %149, %cst_51 [2] : vector<1x8x8xf32> to vector<1x8xf32>
    %151 = vector.shape_cast %150 : vector<1x8xf32> to vector<1x8x1xf32>
    %152 = arith.truncf %149 : vector<1x8x8xf32> to vector<1x8x8xbf16>
    "tpu.trace_start"() <{level = 10 : i32, message = "bqk,bkd->bqd"}> : () -> ()
    %cst_52 = arith.constant dense<0.000000e+00> : vector<1x8x4xf32>
    %153 = tpu.matmul %152, %143, %cst_52 {dimension_numbers = #tpu.dot_dimension_numbers<[2], [1], [1], [2], [0, 0, 0, 1, 1, 2], [0], [0]>} : vector<1x8x8xbf16>, vector<1x8x4xbf16>, vector<1x8x4xf32> -> vector<1x8x4xf32>
    "tpu.trace_stop"() : () -> ()
    %154 = tpu.reciprocal %151 {approx = true} : vector<1x8x1xf32> -> vector<1x8x1xf32>
    %155 = vector.broadcast %154 : vector<1x8x1xf32> to vector<1x8x4xf32>
    %156 = arith.mulf %153, %155 : vector<1x8x4xf32>
    %157 = vector.shape_cast %156 : vector<1x8x4xf32> to vector<8x4xf32>
    %158 = arith.truncf %157 : vector<8x4xf32> to vector<8x4xbf16>
    %c0_53 = arith.constant 0 : index
    %c24 = arith.constant 24 : index
    %159 = vector.load %arg12[%c0_53, %c24] : memref<8x32xbf16, #tpu.memory_space<vmem>>, vector<8x4xbf16>
    tpu.vector_store %arg12[%c0_53, %c24], %158 {strides = array<i32>} : memref<8x32xbf16, #tpu.memory_space<vmem>>, vector<8x4xbf16>,
    %160 = vector.extract_strided_slice %22 {offsets = [0, 0, 28], sizes = [1, 8, 4], strides = [1, 1, 1]} : vector<1x8x32xbf16> to vector<1x8x4xbf16>
    %161 = vector.extract_strided_slice %24 {offsets = [0, 0, 28], sizes = [1, 8, 4], strides = [1, 1, 1]} : vector<1x8x32xbf16> to vector<1x8x4xbf16>
    %162 = vector.extract_strided_slice %26 {offsets = [0, 0, 28], sizes = [1, 8, 4], strides = [1, 1, 1]} : vector<1x8x32xbf16> to vector<1x8x4xbf16>
    "tpu.trace_start"() <{level = 10 : i32, message = "bqd,bkd->bqk"}> : () -> ()
    %cst_54 = arith.constant dense<0.000000e+00> : vector<1x8x8xf32>
    %163 = tpu.matmul %160, %161, %cst_54 {dimension_numbers = #tpu.dot_dimension_numbers<[2], [2], [1], [1], [0, 0, 0, 1, 1, 1], [0], [0]>} : vector<1x8x4xbf16>, vector<1x8x4xbf16>, vector<1x8x8xf32> -> vector<1x8x8xf32>
    "tpu.trace_stop"() : () -> ()
    %cst_55 = arith.constant dense<0xFF800000> : vector<1x8xf32>
    %164 = vector.multi_reduction <maximumf>, %163, %cst_55 [2] : vector<1x8x8xf32> to vector<1x8xf32>
    %165 = vector.shape_cast %164 : vector<1x8xf32> to vector<1x8x1xf32>
    %166 = vector.broadcast %165 : vector<1x8x1xf32> to vector<1x8x8xf32>
    %167 = arith.subf %163, %166 : vector<1x8x8xf32>
    %168 = math.exp %167 : vector<1x8x8xf32>
    %cst_56 = arith.constant dense<0.000000e+00> : vector<1x8xf32>
    %169 = vector.multi_reduction <add>, %168, %cst_56 [2] : vector<1x8x8xf32> to vector<1x8xf32>
    %170 = vector.shape_cast %169 : vector<1x8xf32> to vector<1x8x1xf32>
    %171 = arith.truncf %168 : vector<1x8x8xf32> to vector<1x8x8xbf16>
    "tpu.trace_start"() <{level = 10 : i32, message = "bqk,bkd->bqd"}> : () -> ()
    %cst_57 = arith.constant dense<0.000000e+00> : vector<1x8x4xf32>
    %172 = tpu.matmul %171, %162, %cst_57 {dimension_numbers = #tpu.dot_dimension_numbers<[2], [1], [1], [2], [0, 0, 0, 1, 1, 2], [0], [0]>} : vector<1x8x8xbf16>, vector<1x8x4xbf16>, vector<1x8x4xf32> -> vector<1x8x4xf32>
    "tpu.trace_stop"() : () -> ()
    %173 = tpu.reciprocal %170 {approx = true} : vector<1x8x1xf32> -> vector<1x8x1xf32>
    %174 = vector.broadcast %173 : vector<1x8x1xf32> to vector<1x8x4xf32>
    %175 = arith.mulf %172, %174 : vector<1x8x4xf32>
    %176 = vector.shape_cast %175 : vector<1x8x4xf32> to vector<8x4xf32>
    %177 = arith.truncf %176 : vector<8x4xf32> to vector<8x4xbf16>
    %c0_58 = arith.constant 0 : index
    %c28 = arith.constant 28 : index
    %178 = vector.load %arg12[%c0_58, %c28] : memref<8x32xbf16, #tpu.memory_space<vmem>>, vector<8x4xbf16>
    tpu.vector_store %arg12[%c0_58, %c28], %177 {strides = array<i32>} : memref<8x32xbf16, #tpu.memory_space<vmem>>, vector<8x4xbf16>,
    %c0_59 = arith.constant 0 : index
    %c0_60 = arith.constant 0 : index
    %179 = vector.load %arg12[%c0_59, %c0_60] : memref<8x32xbf16, #tpu.memory_space<vmem>>, vector<8x32xbf16>
    %c0_61 = arith.constant 0 : index
    %c0_62 = arith.constant 0 : index
    %180 = vector.load %arg9[%c0_61, %c0_62] : memref<32x128xbf16, #tpu.memory_space<vmem>>, vector<32x128xbf16>
    %cst_63 = arith.constant dense<0.000000e+00> : vector<8x128xf32>
    %181 = tpu.matmul %179, %180, %cst_63 {dimension_numbers = #tpu.dot_dimension_numbers<[1], [0], [0], [1], [0, 0, 1, 1], [], []>} : vector<8x32xbf16>, vector<32x128xbf16>, vector<8x128xf32> -> vector<8x128xf32>
    %c0_64 = arith.constant 0 : index
    %c0_65 = arith.constant 0 : index
    %182 = vector.load %arg10[%c0_64, %c0_65] : memref<1x128xf32, #tpu.memory_space<vmem>>, vector<1x128xf32>
    %183 = vector.broadcast %182 : vector<1x128xf32> to vector<8x128xf32>
    %184 = arith.addf %181, %183 : vector<8x128xf32>
    %cst_66 = arith.constant 0.000000e+00 : f32
    %185 = vector.broadcast %cst_66 : f32 to vector<8x128xf32>
    %186 = arith.cmpf ogt, %184, %185 : vector<8x128xf32>
    %cst_67 = arith.constant 0.00999999977 : f32
    %187 = vector.broadcast %cst_67 : f32 to vector<8x128xf32>
    %188 = arith.mulf %187, %184 : vector<8x128xf32>
    %189 = arith.select %186, %184, %188 : vector<8x128xi1>, vector<8x128xf32>
    %c0_68 = arith.constant 0 : index
    %c0_69 = arith.constant 0 : index
    %190 = vector.load %arg11[%c0_68, %c0_69] : memref<8x128xf32, #tpu.memory_space<vmem>>, vector<8x128xf32>
    tpu.vector_store %arg11[%c0_68, %c0_69], %189 {strides = array<i32>} : memref<8x128xf32, #tpu.memory_space<vmem>>, vector<8x128xf32>,
    return
  }
  func.func @transform_0(%arg0: i32) -> (i32, i32) {
    %c0_i32 = arith.constant 0 : i32
    %c0_i32_0 = arith.constant 0 : i32
    return %arg0, %c0_i32 : i32, i32
  }
  func.func @transform_1(%arg0: i32) -> (i32, i32) {
    %c0_i32 = arith.constant 0 : i32
    %c0_i32_0 = arith.constant 0 : i32
    return %arg0, %c0_i32 : i32, i32
  }
  func.func @transform_2(%arg0: i32) -> (i32, i32) {
    %c0_i32 = arith.constant 0 : i32
    %c0_i32_0 = arith.constant 0 : i32
    %c0_i32_1 = arith.constant 0 : i32
    return %c0_i32, %c0_i32_0 : i32, i32
  }
  func.func @transform_3(%arg0: i32) -> (i32, i32) {
    %c0_i32 = arith.constant 0 : i32
    %c0_i32_0 = arith.constant 0 : i32
    %c0_i32_1 = arith.constant 0 : i32
    return %c0_i32, %c0_i32_0 : i32, i32
  }
  func.func @transform_4(%arg0: i32) -> (i32, i32) {
    %c0_i32 = arith.constant 0 : i32
    %c0_i32_0 = arith.constant 0 : i32
    %c0_i32_1 = arith.constant 0 : i32
    return %c0_i32, %c0_i32_0 : i32, i32
  }
  func.func @transform_5(%arg0: i32) -> (i32, i32) {
    %c0_i32 = arith.constant 0 : i32
    %c0_i32_0 = arith.constant 0 : i32
    %c0_i32_1 = arith.constant 0 : i32
    return %c0_i32, %c0_i32_0 : i32, i32
  }
  func.func @transform_6(%arg0: i32) -> (i32, i32) {
    %c0_i32 = arith.constant 0 : i32
    %c0_i32_0 = arith.constant 0 : i32
    %c0_i32_1 = arith.constant 0 : i32
    return %c0_i32, %c0_i32_0 : i32, i32
  }
  func.func @transform_7(%arg0: i32) -> (i32, i32) {
    %c0_i32 = arith.constant 0 : i32
    %c0_i32_0 = arith.constant 0 : i32
    %c0_i32_1 = arith.constant 0 : i32
    return %c0_i32, %c0_i32_0 : i32, i32
  }
  func.func @transform_8(%arg0: i32) -> (i32, i32) {
    %c0_i32 = arith.constant 0 : i32
    %c0_i32_0 = arith.constant 0 : i32
    %c0_i32_1 = arith.constant 0 : i32
    return %c0_i32, %c0_i32_0 : i32, i32
  }
  func.func @transform_9(%arg0: i32) -> (i32, i32) {
    %c0_i32 = arith.constant 0 : i32
    %c0_i32_0 = arith.constant 0 : i32
    %c0_i32_1 = arith.constant 0 : i32
    return %c0_i32, %c0_i32_0 : i32, i32
  }
  func.func @transform_10(%arg0: i32) -> (i32, i32) {
    %c0_i32 = arith.constant 0 : i32
    %c0_i32_0 = arith.constant 0 : i32
    return %arg0, %c0_i32 : i32, i32
  }
}

</mosaic_0001>

<llo_original>
// kernel: tpu_custom_call.1
$region0: #{tpu_custom_call.1}
  #allocation0 [shape = 'u32[]', space=smem, size = 0x4, offset = 0x4, fixed_abs, tag = 'smem constant byte address 0x4 - core index']
  #allocation1 [shape = 'u32[144,128]{1,0:T(1,128)}', space=vmem, size = 0x12000, scoped, tag = 'internal scratch']
  #allocation2 [shape = 'bf16[8,32]{1,0:T(8,128)(2,1)}', space=vmem, size = 0x800, scoped, tag = 'scratch operand']
  %s0 = inlined_call_operand.hbm [shape: f32[16,128], index: 0, kind: input, shape index: {}]
  %s1 = inlined_call_operand.hbm [shape: f32[16,128], index: 1, kind: input, shape index: {}]
  %s2 = inlined_call_operand.hbm [shape: bf16[128,32], index: 2, kind: input, shape index: {}]
  %s3 = inlined_call_operand.hbm [shape: f32[1,32], index: 3, kind: input, shape index: {}]
  %s4 = inlined_call_operand.hbm [shape: bf16[128,32], index: 4, kind: input, shape index: {}]
  %s5 = inlined_call_operand.hbm [shape: f32[1,32], index: 5, kind: input, shape index: {}]
  %s6 = inlined_call_operand.hbm [shape: bf16[128,32], index: 6, kind: input, shape index: {}]
  %s7 = inlined_call_operand.hbm [shape: f32[1,32], index: 7, kind: input, shape index: {}]
  %s8 = inlined_call_operand.hbm [shape: bf16[32,128], index: 8, kind: input, shape index: {}]
  %s9 = inlined_call_operand.hbm [shape: f32[1,128], index: 9, kind: input, shape index: {}]
  %s10 = inlined_call_operand.hbm [shape: f32[16,128], index: 10, kind: output, shape index: {}]
  %s11 = sld [smem:[#allocation0]]
  $region113: #{tpu_custom_call.1} parent=0
    _
  %s13 = ssub.s32 1, %s11
  %s14 = scalar_select 0, %s13, %s11
  $region1: #{tpu_custom_call.1} parent=0
    #allocation3 [shape = 'u8[8192]{0}', space=vmem, size = 0x2000, scoped, tag = 'input window, operand 0']
    #allocation4 [shape = 's32[2]{0}', space=sflag, size = 0x8, scoped, tag = 'scoped memory for tpu_custom_call.1']
    #allocation5 [shape = 's32[2]{0}', space=sflag, size = 0x8, scoped, tag = 'scoped memory for tpu_custom_call.1']
    #allocation6 [shape = 'u8[8192]{0}', space=vmem, size = 0x2000, scoped, tag = 'input window, operand 1']
    #allocation7 [shape = 's32[2]{0}', space=sflag, size = 0x8, scoped, tag = 'scoped memory for tpu_custom_call.1']
    #allocation8 [shape = 'u8[32768]{0}', space=vmem, size = 0x8000, scoped, tag = 'input window, operand 2, single buffered']
    #allocation9 [shape = 'u8[512]{0}', space=vmem, size = 0x400, scoped, tag = 'input window, operand 3, single buffered']
    #allocation10 [shape = 's32[1]{0}', space=sflag, size = 0x4, scoped, tag = 'scoped memory for tpu_custom_call.1']
    #allocation11 [shape = 'u8[32768]{0}', space=vmem, size = 0x8000, scoped, tag = 'input window, operand 4, single buffered']
    #allocation12 [shape = 'u8[512]{0}', space=vmem, size = 0x400, scoped, tag = 'input window, operand 5, single buffered']
    #allocation13 [shape = 's32[1]{0}', space=sflag, size = 0x4, scoped, tag = 'scoped memory for tpu_custom_call.1']
    #allocation14 [shape = 'u8[32768]{0}', space=vmem, size = 0x8000, scoped, tag = 'input window, operand 6, single buffered']
    #allocation15 [shape = 'u8[512]{0}', space=vmem, size = 0x400, scoped, tag = 'input window, operand 7, single buffered']
    #allocation16 [shape = 's32[1]{0}', space=sflag, size = 0x4, scoped, tag = 'scoped memory for tpu_custom_call.1']
    #allocation17 [shape = 'u8[8192]{0}', space=vmem, size = 0x2000, scoped, tag = 'input window, operand 8, single buffered']
    #allocation18 [shape = 'u8[512]{0}', space=vmem, size = 0x400, scoped, tag = 'input window, operand 9, single buffered']
    #allocation19 [shape = 's32[1]{0}', space=sflag, size = 0x4, scoped, tag = 'scoped memory for tpu_custom_call.1']
    #allocation20 [shape = 'u8[8192]{0}', space=vmem, size = 0x2000, scoped, tag = 'output window, operand 0']
    %15 = vsyncpa [#allocation4], 0
    %s16 = scalar_lea.sflag [#allocation4], 1
    %17 = vsyncpa %s16, 0
    %18 = vsyncpa [#allocation7], 0
    %s19 = scalar_lea.sflag [#allocation7], 1
    %20 = vsyncpa %s19, 0
    %21 = vsyncpa [#allocation10], 0
    %22 = vsyncpa [#allocation13], 0
    %23 = vsyncpa [#allocation16], 0
    %24 = vsyncpa [#allocation19], 0
    %25 = vsyncpa [#allocation5], 0
    %s26 = scalar_lea.sflag [#allocation5], 1
    %27 = vsyncpa %s26, 0
    loop: start=0, step=1, limit=4
    $region2: #{tpu_custom_call.1} parent=1 // loop_pre_header
      _
    $region3: #{tpu_custom_call.1} parent=1 // loop_header
      %s29 = sphi 0, %s33
      %p30 = scmp.ge.s32.totalorder %s29, 4
      %s39 = sphi 0, %s41
      %s42 = sphi 0, %s39
      %s43 = sphi 0, %s42
      %s59 = sphi 0, %s43
      %s65 = sphi 0, %s67
      %s68 = sphi 0, %s65
      %s69 = sphi 0, %s68
      %s85 = sphi 0, %s69
      %s89 = sphi 0, %s89
      %s91 = sphi 0, %s89
      %s92 = sphi 0, %s91
      %s106 = sphi 0, %s92
      %s110 = sphi 0, %s110
      %s112 = sphi 0, %s110
      %s113 = sphi 0, %s112
      %s127 = sphi 0, %s113
      %s131 = sphi 0, %s131
      %s133 = sphi 0, %s131
      %s134 = sphi 0, %s133
      %s148 = sphi 0, %s134
      %s152 = sphi 0, %s152
      %s154 = sphi 0, %s152
      %s155 = sphi 0, %s154
      %s169 = sphi 0, %s155
      %s173 = sphi 0, %s173
      %s175 = sphi 0, %s173
      %s176 = sphi 0, %s175
      %s190 = sphi 0, %s176
      %s194 = sphi 0, %s194
      %s196 = sphi 0, %s194
      %s197 = sphi 0, %s196
      %s211 = sphi 0, %s197
      %s215 = sphi 0, %s215
      %s217 = sphi 0, %s215
      %s218 = sphi 0, %s217
      %s232 = sphi 0, %s218
      %s236 = sphi 0, %s236
      %s238 = sphi 0, %s236
      %s239 = sphi 0, %s238
      %s253 = sphi 0, %s239
      %s259 = sphi 0, %s261
      %s262 = sphi 0, %s259
      %s263 = sphi 0, %s262
      %s279 = sphi 0, %s263
    $region4: #{tpu_custom_call.1} parent=1 // loop_header_branch
      %32 = sbr.rel (%p30) target = $region8
    $region5: #{tpu_custom_call.1} parent=1 // loop_body
      %s34 = ssub.s32 %s29, 1
      %s35 = ssub.s32 %s29, 2
      %s36 = sadd.s32 %s29, 1
      %s37 = ssub.s32 %s29, %s36
      %p38 = scmp.eq.s32.totalorder %s37, 0
      %s40 = sadd.s32 %s39, 1
      %s41 = scalar_select %p38, %s39, %s40
      %p44 = pneg %p38
      %p45 = scmp.eq.s32.totalorder %s29, 1
      %p46 = por %p44, %p45
      %p47 = scmp.ne.s32.totalorder %s39, %s42
      %p48 = scmp.eq.s32.totalorder %s29, 0
      %p49 = por %p47, %p48
      %p50 = scmp.ne.s32.totalorder %s39, %s42
      %p51 = scmp.eq.s32.totalorder %s34, 1
      %p52 = por %p50, %p51
      %p53 = scmp.ne.s32.totalorder %s42, %s43
      %p54 = scmp.eq.s32.totalorder %s34, 0
      %p55 = por %p53, %p54
      %p56 = scmp.ne.s32.totalorder %s42, %s43
      %p57 = scmp.eq.s32.totalorder %s35, 1
      %p58 = por %p56, %p57
      %p60 = scmp.ne.s32.totalorder %s43, %s59
      %p61 = scmp.eq.s32.totalorder %s35, 0
      %p62 = por %p60, %p61
      %s63 = ssub.s32 %s29, %s36
      %p64 = scmp.eq.s32.totalorder %s63, 0
      %s66 = sadd.s32 %s65, 1
      %s67 = scalar_select %p64, %s65, %s66
      %p70 = pneg %p64
      %p71 = scmp.eq.s32.totalorder %s29, 1
      %p72 = por %p70, %p71
      %p73 = scmp.ne.s32.totalorder %s65, %s68
      %p74 = scmp.eq.s32.totalorder %s29, 0
      %p75 = por %p73, %p74
      %p76 = scmp.ne.s32.totalorder %s65, %s68
      %p77 = scmp.eq.s32.totalorder %s34, 1
      %p78 = por %p76, %p77
      %p79 = scmp.ne.s32.totalorder %s68, %s69
      %p80 = scmp.eq.s32.totalorder %s34, 0
      %p81 = por %p79, %p80
      %p82 = scmp.ne.s32.totalorder %s68, %s69
      %p83 = scmp.eq.s32.totalorder %s35, 1
      %p84 = por %p82, %p83
      %p86 = scmp.ne.s32.totalorder %s69, %s85
      %p87 = scmp.eq.s32.totalorder %s35, 0
      %p88 = por %p86, %p87
      %s90 = sadd.s32 %s89, 1
      %p93 = scmp.eq.s32.totalorder %s29, 1
      %p94 = scmp.ne.s32.totalorder %s89, %s91
      %p95 = scmp.eq.s32.totalorder %s29, 0
      %p96 = por %p94, %p95
      %p97 = scmp.ne.s32.totalorder %s89, %s91
      %p98 = scmp.eq.s32.totalorder %s34, 1
      %p99 = por %p97, %p98
      %p100 = scmp.ne.s32.totalorder %s91, %s92
      %p101 = scmp.eq.s32.totalorder %s34, 0
      %p102 = por %p100, %p101
      %p103 = scmp.ne.s32.totalorder %s91, %s92
      %p104 = scmp.eq.s32.totalorder %s35, 1
      %p105 = por %p103, %p104
      %p107 = scmp.ne.s32.totalorder %s92, %s106
      %p108 = scmp.eq.s32.totalorder %s35, 0
      %p109 = por %p107, %p108
      %s111 = sadd.s32 %s110, 1
      %p114 = scmp.eq.s32.totalorder %s29, 1
      %p115 = scmp.ne.s32.totalorder %s110, %s112
      %p116 = scmp.eq.s32.totalorder %s29, 0
      %p117 = por %p115, %p116
      %p118 = scmp.ne.s32.totalorder %s110, %s112
      %p119 = scmp.eq.s32.totalorder %s34, 1
      %p120 = por %p118, %p119
      %p121 = scmp.ne.s32.totalorder %s112, %s113
      %p122 = scmp.eq.s32.totalorder %s34, 0
      %p123 = por %p121, %p122
      %p124 = scmp.ne.s32.totalorder %s112, %s113
      %p125 = scmp.eq.s32.totalorder %s35, 1
      %p126 = por %p124, %p125
      %p128 = scmp.ne.s32.totalorder %s113, %s127
      %p129 = scmp.eq.s32.totalorder %s35, 0
      %p130 = por %p128, %p129
      %s132 = sadd.s32 %s131, 1
      %p135 = scmp.eq.s32.totalorder %s29, 1
      %p136 = scmp.ne.s32.totalorder %s131, %s133
      %p137 = scmp.eq.s32.totalorder %s29, 0
      %p138 = por %p136, %p137
      %p139 = scmp.ne.s32.totalorder %s131, %s133
      %p140 = scmp.eq.s32.totalorder %s34, 1
      %p141 = por %p139, %p140
      %p142 = scmp.ne.s32.totalorder %s133, %s134
      %p143 = scmp.eq.s32.totalorder %s34, 0
      %p144 = por %p142, %p143
      %p145 = scmp.ne.s32.totalorder %s133, %s134
      %p146 = scmp.eq.s32.totalorder %s35, 1
      %p147 = por %p145, %p146
      %p149 = scmp.ne.s32.totalorder %s134, %s148
      %p150 = scmp.eq.s32.totalorder %s35, 0
      %p151 = por %p149, %p150
      %s153 = sadd.s32 %s152, 1
      %p156 = scmp.eq.s32.totalorder %s29, 1
      %p157 = scmp.ne.s32.totalorder %s152, %s154
      %p158 = scmp.eq.s32.totalorder %s29, 0
      %p159 = por %p157, %p158
      %p160 = scmp.ne.s32.totalorder %s152, %s154
      %p161 = scmp.eq.s32.totalorder %s34, 1
      %p162 = por %p160, %p161
      %p163 = scmp.ne.s32.totalorder %s154, %s155
      %p164 = scmp.eq.s32.totalorder %s34, 0
      %p165 = por %p163, %p164
      %p166 = scmp.ne.s32.totalorder %s154, %s155
      %p167 = scmp.eq.s32.totalorder %s35, 1
      %p168 = por %p166, %p167
      %p170 = scmp.ne.s32.totalorder %s155, %s169
      %p171 = scmp.eq.s32.totalorder %s35, 0
      %p172 = por %p170, %p171
      %s174 = sadd.s32 %s173, 1
      %p177 = scmp.eq.s32.totalorder %s29, 1
      %p178 = scmp.ne.s32.totalorder %s173, %s175
      %p179 = scmp.eq.s32.totalorder %s29, 0
      %p180 = por %p178, %p179
      %p181 = scmp.ne.s32.totalorder %s173, %s175
      %p182 = scmp.eq.s32.totalorder %s34, 1
      %p183 = por %p181, %p182
      %p184 = scmp.ne.s32.totalorder %s175, %s176
      %p185 = scmp.eq.s32.totalorder %s34, 0
      %p186 = por %p184, %p185
      %p187 = scmp.ne.s32.totalorder %s175, %s176
      %p188 = scmp.eq.s32.totalorder %s35, 1
      %p189 = por %p187, %p188
      %p191 = scmp.ne.s32.totalorder %s176, %s190
      %p192 = scmp.eq.s32.totalorder %s35, 0
      %p193 = por %p191, %p192
      %s195 = sadd.s32 %s194, 1
      %p198 = scmp.eq.s32.totalorder %s29, 1
      %p199 = scmp.ne.s32.totalorder %s194, %s196
      %p200 = scmp.eq.s32.totalorder %s29, 0
      %p201 = por %p199, %p200
      %p202 = scmp.ne.s32.totalorder %s194, %s196
      %p203 = scmp.eq.s32.totalorder %s34, 1
      %p204 = por %p202, %p203
      %p205 = scmp.ne.s32.totalorder %s196, %s197
      %p206 = scmp.eq.s32.totalorder %s34, 0
      %p207 = por %p205, %p206
      %p208 = scmp.ne.s32.totalorder %s196, %s197
      %p209 = scmp.eq.s32.totalorder %s35, 1
      %p210 = por %p208, %p209
      %p212 = scmp.ne.s32.totalorder %s197, %s211
      %p213 = scmp.eq.s32.totalorder %s35, 0
      %p214 = por %p212, %p213
      %s216 = sadd.s32 %s215, 1
      %p219 = scmp.eq.s32.totalorder %s29, 1
      %p220 = scmp.ne.s32.totalorder %s215, %s217
      %p221 = scmp.eq.s32.totalorder %s29, 0
      %p222 = por %p220, %p221
      %p223 = scmp.ne.s32.totalorder %s215, %s217
      %p224 = scmp.eq.s32.totalorder %s34, 1
      %p225 = por %p223, %p224
      %p226 = scmp.ne.s32.totalorder %s217, %s218
      %p227 = scmp.eq.s32.totalorder %s34, 0
      %p228 = por %p226, %p227
      %p229 = scmp.ne.s32.totalorder %s217, %s218
      %p230 = scmp.eq.s32.totalorder %s35, 1
      %p231 = por %p229, %p230
      %p233 = scmp.ne.s32.totalorder %s218, %s232
      %p234 = scmp.eq.s32.totalorder %s35, 0
      %p235 = por %p233, %p234
      %s237 = sadd.s32 %s236, 1
      %p240 = scmp.eq.s32.totalorder %s29, 1
      %p241 = scmp.ne.s32.totalorder %s236, %s238
      %p242 = scmp.eq.s32.totalorder %s29, 0
      %p243 = por %p241, %p242
      %p244 = scmp.ne.s32.totalorder %s236, %s238
      %p245 = scmp.eq.s32.totalorder %s34, 1
      %p246 = por %p244, %p245
      %p247 = scmp.ne.s32.totalorder %s238, %s239
      %p248 = scmp.eq.s32.totalorder %s34, 0
      %p249 = por %p247, %p248
      %p250 = scmp.ne.s32.totalorder %s238, %s239
      %p251 = scmp.eq.s32.totalorder %s35, 1
      %p252 = por %p250, %p251
      %p254 = scmp.ne.s32.totalorder %s239, %s253
      %p255 = scmp.eq.s32.totalorder %s35, 0
      %p256 = por %p254, %p255
      %s257 = ssub.s32 %s29, %s36
      %p258 = scmp.eq.s32.totalorder %s257, 0
      %s260 = sadd.s32 %s259, 1
      %s261 = scalar_select %p258, %s259, %s260
      %p264 = pneg %p258
      %p265 = scmp.eq.s32.totalorder %s29, 1
      %p266 = por %p264, %p265
      %p267 = scmp.ne.s32.totalorder %s259, %s262
      %p268 = scmp.eq.s32.totalorder %s29, 0
      %p269 = por %p267, %p268
      %p270 = scmp.ne.s32.totalorder %s259, %s262
      %p271 = scmp.eq.s32.totalorder %s34, 1
      %p272 = por %p270, %p271
      %p273 = scmp.ne.s32.totalorder %s262, %s263
      %p274 = scmp.eq.s32.totalorder %s34, 0
      %p275 = por %p273, %p274
      %p276 = scmp.ne.s32.totalorder %s262, %s263
      %p277 = scmp.eq.s32.totalorder %s35, 1
      %p278 = por %p276, %p277
      %p280 = scmp.ne.s32.totalorder %s263, %s279
      %p281 = scmp.eq.s32.totalorder %s35, 0
      %p282 = por %p280, %p281
      %p283 = scmp.le.s32.totalorder 1, %s29
      %p284 = scmp.lt.s32.totalorder %s29, 3
      %p285 = pnand %p283, %p284
      %p286 = pneg %p285
      // Predicated region
      $region9: #{tpu_custom_call.1} parent=5 // pred_check
        _
      $region10: #{tpu_custom_call.1} parent=5 // pred_check_branch
        %288 = sbr.rel (%p285) target = $region12
      $region11: #{tpu_custom_call.1} parent=5 // pred_region
        %s289 = ssub.s32 %s29, 1
        // Predicated region
        $region13: #{tpu_custom_call.1} parent=11 // pred_check
          %p290 = pneg %p102
        $region14: #{tpu_custom_call.1} parent=11 // pred_check_branch
          %292 = sbr.rel (%p290) target = $region16
        $region15: #{tpu_custom_call.1} parent=11 // pred_region
          %s294 = ssub.s32 1024, 1024
          %295 = vsyncadd [#allocation7], %s294
          %s296 = sshll.u32 [#allocation8], 4
          %s297 = int_to_ptr.vmem [resolvable:$true] %s296
          %302 = dma.hbm_to_vmem [thread:$0]  %s2, 1024, %s297, [#allocation7], 64, 64, 4
        $region16: #{tpu_custom_call.1} parent=11 // pred_fallthru
          _
        // Predicated region
        $region17: #{tpu_custom_call.1} parent=11 // pred_check
          %p303 = pneg %p123
        $region18: #{tpu_custom_call.1} parent=11 // pred_check_branch
          %305 = sbr.rel (%p303) target = $region20
        $region19: #{tpu_custom_call.1} parent=11 // pred_region
          %s307 = ssub.s32 16, 16
          %308 = vsyncadd [#allocation10], %s307
          %s310 = sshll.u32 [#allocation9], 4
          %s311 = int_to_ptr.vmem [resolvable:$true] %s310
          %313 = dma.hbm_to_vmem [thread:$0]  %s3, 16, %s311, [#allocation10]
        $region20: #{tpu_custom_call.1} parent=11 // pred_fallthru
          _
        // Predicated region
        $region21: #{tpu_custom_call.1} parent=11 // pred_check
          %p314 = pneg %p144
        $region22: #{tpu_custom_call.1} parent=11 // pred_check_branch
          %316 = sbr.rel (%p314) target = $region24
        $region23: #{tpu_custom_call.1} parent=11 // pred_region
          %s318 = ssub.s32 1024, 1024
          %319 = vsyncadd [#allocation10], %s318
          %s320 = sshll.u32 [#allocation11], 4
          %s321 = int_to_ptr.vmem [resolvable:$true] %s320
          %326 = dma.hbm_to_vmem [thread:$0]  %s4, 1024, %s321, [#allocation10], 64, 64, 4
        $region24: #{tpu_custom_call.1} parent=11 // pred_fallthru
          _
        // Predicated region
        $region25: #{tpu_custom_call.1} parent=11 // pred_check
          %p327 = pneg %p165
        $region26: #{tpu_custom_call.1} parent=11 // pred_check_branch
          %329 = sbr.rel (%p327) target = $region28
        $region27: #{tpu_custom_call.1} parent=11 // pred_region
          %s331 = ssub.s32 16, 16
          %332 = vsyncadd [#allocation13], %s331
          %s334 = sshll.u32 [#allocation12], 4
          %s335 = int_to_ptr.vmem [resolvable:$true] %s334
          %337 = dma.hbm_to_vmem [thread:$0]  %s5, 16, %s335, [#allocation13]
        $region28: #{tpu_custom_call.1} parent=11 // pred_fallthru
          _
        // Predicated region
        $region29: #{tpu_custom_call.1} parent=11 // pred_check
          %p338 = pneg %p186
        $region30: #{tpu_custom_call.1} parent=11 // pred_check_branch
          %340 = sbr.rel (%p338) target = $region32
        $region31: #{tpu_custom_call.1} parent=11 // pred_region
          %s342 = ssub.s32 1024, 1024
          %343 = vsyncadd [#allocation13], %s342
          %s344 = sshll.u32 [#allocation14], 4
          %s345 = int_to_ptr.vmem [resolvable:$true] %s344
          %350 = dma.hbm_to_vmem [thread:$0]  %s6, 1024, %s345, [#allocation13], 64, 64, 4
        $region32: #{tpu_custom_call.1} parent=11 // pred_fallthru
          _
        // Predicated region
        $region33: #{tpu_custom_call.1} parent=11 // pred_check
          %p351 = pneg %p207
        $region34: #{tpu_custom_call.1} parent=11 // pred_check_branch
          %353 = sbr.rel (%p351) target = $region36
        $region35: #{tpu_custom_call.1} parent=11 // pred_region
          %s355 = ssub.s32 16, 16
          %356 = vsyncadd [#allocation16], %s355
          %s358 = sshll.u32 [#allocation15], 4
          %s359 = int_to_ptr.vmem [resolvable:$true] %s358
          %361 = dma.hbm_to_vmem [thread:$0]  %s7, 16, %s359, [#allocation16]
        $region36: #{tpu_custom_call.1} parent=11 // pred_fallthru
          _
        // Predicated region
        $region37: #{tpu_custom_call.1} parent=11 // pred_check
          %p362 = pneg %p228
        $region38: #{tpu_custom_call.1} parent=11 // pred_check_branch
          %364 = sbr.rel (%p362) target = $region40
        $region39: #{tpu_custom_call.1} parent=11 // pred_region
          %s366 = ssub.s32 256, 256
          %367 = vsyncadd [#allocation16], %s366
          %s368 = sshll.u32 [#allocation17], 4
          %s369 = int_to_ptr.vmem [resolvable:$true] %s368
          %374 = dma.hbm_to_vmem [thread:$0]  %s8, 256, %s369, [#allocation16], 64, 64, 4
        $region40: #{tpu_custom_call.1} parent=11 // pred_fallthru
          _
        // Predicated region
        $region41: #{tpu_custom_call.1} parent=11 // pred_check
          %p375 = pneg %p249
        $region42: #{tpu_custom_call.1} parent=11 // pred_check_branch
          %377 = sbr.rel (%p375) target = $region44
        $region43: #{tpu_custom_call.1} parent=11 // pred_region
          %s379 = ssub.s32 16, 16
          %380 = vsyncadd [#allocation19], %s379
          %s382 = sshll.u32 [#allocation18], 4
          %s383 = int_to_ptr.vmem [resolvable:$true] %s382
          %385 = dma.hbm_to_vmem [thread:$0]  %s9, 16, %s383, [#allocation19]
        $region44: #{tpu_custom_call.1} parent=11 // pred_fallthru
          _
      $region12: #{tpu_custom_call.1} parent=5 // pred_fallthru
        _
      %p386 = scmp.lt.s32.totalorder %s29, 2
      // Predicated region
      $region45: #{tpu_custom_call.1} parent=5 // pred_check
        %p387 = pneg %p386
      $region46: #{tpu_custom_call.1} parent=5 // pred_check_branch
        %389 = sbr.rel (%p387) target = $region48
      $region47: #{tpu_custom_call.1} parent=5 // pred_region
        // Predicated region
        $region49: #{tpu_custom_call.1} parent=47 // pred_check
          %p390 = pneg %p49
        $region50: #{tpu_custom_call.1} parent=47 // pred_check_branch
          %392 = sbr.rel (%p390) target = $region52
        $region51: #{tpu_custom_call.1} parent=47 // pred_region
          %s393 = sand.u32 %s39, 1
          %s394 = scalar_lea.sflag [#allocation4], %s393
          %s395 = sand.u32 %s39, 1
          %s396 = smul.addr %s395, 8
          %s397 = scalar_lea.vmem [#allocation3], %s396
          %s399 = ssub.s32 128, 128
          %400 = vsyncadd %s394, %s399
          %s401 = smul.addr %s29, 128
          %s402 = scalar_lea.hbm %s0, %s401
          %s404 = sshll.u32 %s397, 4
          %s405 = int_to_ptr.vmem [resolvable:$true] %s404
          %407 = dma.hbm_to_vmem [thread:$0]  %s402, 128, %s405, %s394
        $region52: #{tpu_custom_call.1} parent=47 // pred_fallthru
          _
        // Predicated region
        $region53: #{tpu_custom_call.1} parent=47 // pred_check
          %p408 = pneg %p75
        $region54: #{tpu_custom_call.1} parent=47 // pred_check_branch
          %410 = sbr.rel (%p408) target = $region56
        $region55: #{tpu_custom_call.1} parent=47 // pred_region
          %s411 = sand.u32 %s29, 1
          %s412 = scalar_lea.sflag [#allocation7], %s411
          %s413 = sand.u32 %s65, 1
          %s414 = smul.addr %s413, 8
          %s415 = scalar_lea.vmem [#allocation6], %s414
          %s417 = ssub.s32 128, 128
          %418 = vsyncadd %s412, %s417
          %s419 = smul.addr %s29, 128
          %s420 = scalar_lea.hbm %s1, %s419
          %s422 = sshll.u32 %s415, 4
          %s423 = int_to_ptr.vmem [resolvable:$true] %s422
          %425 = dma.hbm_to_vmem [thread:$0]  %s420, 128, %s423, %s412
        $region56: #{tpu_custom_call.1} parent=47 // pred_fallthru
          _
      $region48: #{tpu_custom_call.1} parent=5 // pred_fallthru
        _
      %p426 = scmp.le.s32.totalorder 1, %s29
      %p427 = scmp.lt.s32.totalorder %s29, 3
      %p428 = pnand %p426, %p427
      %p429 = pneg %p428
      // Predicated region
      $region57: #{tpu_custom_call.1} parent=5 // pred_check
        _
      $region58: #{tpu_custom_call.1} parent=5 // pred_check_branch
        %431 = sbr.rel (%p428) target = $region60
      $region59: #{tpu_custom_call.1} parent=5 // pred_region
        %s432 = ssub.s32 %s29, 1
        %s433 = sand.u32 %s42, 1
        %s434 = scalar_lea.sflag [#allocation4], %s433
        %s435 = sand.u32 %s42, 1
        %s436 = smul.addr %s435, 8
        %s437 = scalar_lea.vmem [#allocation3], %s436
        // Predicated region
        $region61: #{tpu_custom_call.1} parent=59 // pred_check
          %p438 = pneg %p55
        $region62: #{tpu_custom_call.1} parent=59 // pred_check_branch
          %440 = sbr.rel (%p438) target = $region64
        $region63: #{tpu_custom_call.1} parent=59 // pred_region
          %441 = dma.done %s434, 128
        $region64: #{tpu_custom_call.1} parent=59 // pred_fallthru
          _
        %s442 = sand.u32 %s34, 1
        %s443 = scalar_lea.sflag [#allocation7], %s442
        %s444 = sand.u32 %s68, 1
        %s445 = smul.addr %s444, 8
        %s446 = scalar_lea.vmem [#allocation6], %s445
        // Predicated region
        $region65: #{tpu_custom_call.1} parent=59 // pred_check
          %p447 = pneg %p81
        $region66: #{tpu_custom_call.1} parent=59 // pred_check_branch
          %449 = sbr.rel (%p447) target = $region68
        $region67: #{tpu_custom_call.1} parent=59 // pred_region
          %450 = dma.done %s443, 128
        $region68: #{tpu_custom_call.1} parent=59 // pred_fallthru
          _
        // Predicated region
        $region69: #{tpu_custom_call.1} parent=59 // pred_check
          %p451 = pneg %p102
        $region70: #{tpu_custom_call.1} parent=59 // pred_check_branch
          %453 = sbr.rel (%p451) target = $region72
        $region71: #{tpu_custom_call.1} parent=59 // pred_region
          %454 = dma.done [#allocation7], 1024
        $region72: #{tpu_custom_call.1} parent=59 // pred_fallthru
          _
        // Predicated region
        $region73: #{tpu_custom_call.1} parent=59 // pred_check
          %p455 = pneg %p123
        $region74: #{tpu_custom_call.1} parent=59 // pred_check_branch
          %457 = sbr.rel (%p455) target = $region76
        $region75: #{tpu_custom_call.1} parent=59 // pred_region
          %458 = dma.done [#allocation10], 16
        $region76: #{tpu_custom_call.1} parent=59 // pred_fallthru
          _
        // Predicated region
        $region77: #{tpu_custom_call.1} parent=59 // pred_check
          %p459 = pneg %p144
        $region78: #{tpu_custom_call.1} parent=59 // pred_check_branch
          %461 = sbr.rel (%p459) target = $region80
        $region79: #{tpu_custom_call.1} parent=59 // pred_region
          %462 = dma.done [#allocation10], 1024
        $region80: #{tpu_custom_call.1} parent=59 // pred_fallthru
          _
        // Predicated region
        $region81: #{tpu_custom_call.1} parent=59 // pred_check
          %p463 = pneg %p165
        $region82: #{tpu_custom_call.1} parent=59 // pred_check_branch
          %465 = sbr.rel (%p463) target = $region84
        $region83: #{tpu_custom_call.1} parent=59 // pred_region
          %466 = dma.done [#allocation13], 16
        $region84: #{tpu_custom_call.1} parent=59 // pred_fallthru
          _
        // Predicated region
        $region85: #{tpu_custom_call.1} parent=59 // pred_check
          %p467 = pneg %p186
        $region86: #{tpu_custom_call.1} parent=59 // pred_check_branch
          %469 = sbr.rel (%p467) target = $region88
        $region87: #{tpu_custom_call.1} parent=59 // pred_region
          %470 = dma.done [#allocation13], 1024
        $region88: #{tpu_custom_call.1} parent=59 // pred_fallthru
          _
        // Predicated region
        $region89: #{tpu_custom_call.1} parent=59 // pred_check
          %p471 = pneg %p207
        $region90: #{tpu_custom_call.1} parent=59 // pred_check_branch
          %473 = sbr.rel (%p471) target = $region92
        $region91: #{tpu_custom_call.1} parent=59 // pred_region
          %474 = dma.done [#allocation16], 16
        $region92: #{tpu_custom_call.1} parent=59 // pred_fallthru
          _
        // Predicated region
        $region93: #{tpu_custom_call.1} parent=59 // pred_check
          %p475 = pneg %p228
        $region94: #{tpu_custom_call.1} parent=59 // pred_check_branch
          %477 = sbr.rel (%p475) target = $region96
        $region95: #{tpu_custom_call.1} parent=59 // pred_region
          %478 = dma.done [#allocation16], 256
        $region96: #{tpu_custom_call.1} parent=59 // pred_fallthru
          _
        // Predicated region
        $region97: #{tpu_custom_call.1} parent=59 // pred_check
          %p479 = pneg %p249
        $region98: #{tpu_custom_call.1} parent=59 // pred_check_branch
          %481 = sbr.rel (%p479) target = $region100
        $region99: #{tpu_custom_call.1} parent=59 // pred_region
          %482 = dma.done [#allocation19], 16
        $region100: #{tpu_custom_call.1} parent=59 // pred_fallthru
          _
        %s483 = sand.u32 %s42, 1
        %s484 = scalar_lea.sflag [#allocation4], %s483
        %s485 = sand.u32 %s42, 1
        %s486 = smul.addr %s485, 8
        %s487 = scalar_lea.vmem [#allocation3], %s486
        %p488 = pneg %p55
        %p489 = pneg %p52
        %s490 = sand.u32 %s34, 1
        %s491 = scalar_lea.sflag [#allocation7], %s490
        %s492 = sand.u32 %s68, 1
        %s493 = smul.addr %s492, 8
        %s494 = scalar_lea.vmem [#allocation6], %s493
        %p495 = pneg %p81
        %p496 = pneg %p78
        %p497 = pneg %p102
        %p498 = pneg %p99
        %p499 = pneg %p123
        %p500 = pneg %p120
        %p501 = pneg %p144
        %p502 = pneg %p141
        %p503 = pneg %p165
        %p504 = pneg %p162
        %p505 = pneg %p186
        %p506 = pneg %p183
        %p507 = pneg %p207
        %p508 = pneg %p204
        %p509 = pneg %p228
        %p510 = pneg %p225
        %p511 = pneg %p249
        %p512 = pneg %p246
        %p513 = pneg %p275
        %p514 = pneg %p272
        %s515 = sand.u32 %s262, 1
        %s516 = scalar_lea.sflag [#allocation5], %s515
        %s517 = sand.u32 %s262, 1
        %s518 = smul.addr %s517, 8
        %s519 = scalar_lea.vmem [#allocation20], %s518
        %v521 = vld [vmem:[%s437] sm:$0xff]
        %v522 = vpack.c.bf16 %v521, %v521
        %v523 = vld [vmem:[%s446] sm:$0xff]
        %v524 = vpack.c.bf16 %v523, %v523
        %v525 = vld [vmem:[#allocation8] sm:$0xf]
        %v526 = vld [vmem:[#allocation8 + $0x4] sm:$0xf]
        %v527 = vld [vmem:[#allocation8 + $0x8] sm:$0xf]
        %v528 = vld [vmem:[#allocation8 + $0xc] sm:$0xf]
        %v529 = vld [vmem:[#allocation8 + $0x10] sm:$0xf]
        %v530 = vld [vmem:[#allocation8 + $0x14] sm:$0xf]
        %v531 = vld [vmem:[#allocation8 + $0x18] sm:$0xf]
        %v532 = vld [vmem:[#allocation8 + $0x1c] sm:$0xf]
        %v533 = vld [vmem:[#allocation8 + $0x20] sm:$0xf]
        %v534 = vld [vmem:[#allocation8 + $0x24] sm:$0xf]
        %v535 = vld [vmem:[#allocation8 + $0x28] sm:$0xf]
        %v536 = vld [vmem:[#allocation8 + $0x2c] sm:$0xf]
        %v537 = vld [vmem:[#allocation8 + $0x30] sm:$0xf]
        %v538 = vld [vmem:[#allocation8 + $0x34] sm:$0xf]
        %v539 = vld [vmem:[#allocation8 + $0x38] sm:$0xf]
        %v540 = vld [vmem:[#allocation8 + $0x3c] sm:$0xf]
        %v541 = vld [vmem:[#allocation9] sm:$0x1]
        %v543 = vlaneseq
        %v544 = vshrl.u32 %v543, 7
        %v545 = vsub.s32 0, %v544
        %v546 = vrot.slane %v541, %v545
        %v564 = vunpack.c.l.b16 %v525
        %v565 = vunpack.c.l.b16 %v526
        %v566 = vunpack.c.l.b16 %v527
        %v567 = vunpack.c.l.b16 %v528
        %v568 = vunpack.c.l.b16 %v529
        %v569 = vunpack.c.l.b16 %v530
        %v570 = vunpack.c.l.b16 %v531
        %v571 = vunpack.c.l.b16 %v532
        %v572 = vunpack.c.l.b16 %v533
        %v573 = vunpack.c.l.b16 %v534
        %v574 = vunpack.c.l.b16 %v535
        %v575 = vunpack.c.l.b16 %v536
        %v576 = vunpack.c.l.b16 %v537
        %v577 = vunpack.c.l.b16 %v538
        %v578 = vunpack.c.l.b16 %v539
        %v579 = vunpack.c.l.b16 %v540
        %v580 = vpack.c.b16 %v565, %v564
        %v581 = vpack.c.b16 %v567, %v566
        %v582 = vpack.c.b16 %v569, %v568
        %v583 = vpack.c.b16 %v571, %v570
        %v584 = vpack.c.b16 %v573, %v572
        %v585 = vpack.c.b16 %v575, %v574
        %v586 = vpack.c.b16 %v577, %v576
        %v587 = vpack.c.b16 %v579, %v578
        %596 = vmatprep.subr.bf16.mxu0 0
        %597 = vmatpush1.bf16.msra.mxu0 %v580
        %598 = vmatprep.subr.bf16.mxu0 0
        %599 = vmatpush1.bf16.msra.mxu0 %v581
        %600 = vmatprep.subr.bf16.mxu0 0
        %601 = vmatpush1.bf16.msra.mxu0 %v582
        %602 = vmatprep.subr.bf16.mxu0 0
        %603 = vmatpush1.bf16.msra.mxu0 %v583
        %604 = vmatprep.subr.bf16.mxu0 0
        %605 = vmatpush1.bf16.msra.mxu0 %v584
        %606 = vmatprep.subr.bf16.mxu0 0
        %607 = vmatpush1.bf16.msra.mxu0 %v585
        %608 = vmatprep.subr.bf16.mxu0 0
        %609 = vmatpush1.bf16.msra.mxu0 %v586
        %610 = vmatprep.subr.bf16.mxu0 0
        %611 = vmatpush1.bf16.msra.mxu0 %v587
        %612 = vmatprep.subr.bf16.mxu0 0
        %613 = vmatpush1.bf16.msra.mxu0 0
        %614 = vmatprep.subr.bf16.mxu0 0
        %615 = vmatpush1.bf16.msra.mxu0 0
        %616 = vmatprep.subr.bf16.mxu0 0
        %617 = vmatpush1.bf16.msra.mxu0 0
        %618 = vmatprep.subr.bf16.mxu0 0
        %619 = vmatpush1.bf16.msra.mxu0 0
        %620 = vmatprep.subr.bf16.mxu0 0
        %621 = vmatpush1.bf16.msra.mxu0 0
        %622 = vmatprep.subr.bf16.mxu0 0
        %623 = vmatpush1.bf16.msra.mxu0 0
        %624 = vmatprep.subr.bf16.mxu0 0
        %625 = vmatpush1.bf16.msra.mxu0 0
        %626 = vmatprep.subr.bf16.mxu0 0
        %627 = vmatpush1.bf16.msra.mxu0 0
        %628 = vmatprep.mubr.bf16.mxu0 0
        %629 = vmatmul.mubr.bf16.gmra.mrb[0].mxu0 %v524
        %v630 = vpop.f32.mrb[0].mxu0
        %v631 = vadd.f32 %v546, %v630
        %v632 = vpop.f32.mrb[0].mxu0
        %v633 = vpop.f32.mrb[0].mxu0
        %v634 = vpop.f32.mrb[0].mxu0
        %635 = vdwg.mxu0
        %v636 = vmul.f32 %v631, 0.5
        %v637 = vld [vmem:[#allocation11] sm:$0xf]
        %v638 = vld [vmem:[#allocation11 + $0x4] sm:$0xf]
        %v639 = vld [vmem:[#allocation11 + $0x8] sm:$0xf]
        %v640 = vld [vmem:[#allocation11 + $0xc] sm:$0xf]
        %v641 = vld [vmem:[#allocation11 + $0x10] sm:$0xf]
        %v642 = vld [vmem:[#allocation11 + $0x14] sm:$0xf]
        %v643 = vld [vmem:[#allocation11 + $0x18] sm:$0xf]
        %v644 = vld [vmem:[#allocation11 + $0x1c] sm:$0xf]
        %v645 = vld [vmem:[#allocation11 + $0x20] sm:$0xf]
        %v646 = vld [vmem:[#allocation11 + $0x24] sm:$0xf]
        %v647 = vld [vmem:[#allocation11 + $0x28] sm:$0xf]
        %v648 = vld [vmem:[#allocation11 + $0x2c] sm:$0xf]
        %v649 = vld [vmem:[#allocation11 + $0x30] sm:$0xf]
        %v650 = vld [vmem:[#allocation11 + $0x34] sm:$0xf]
        %v651 = vld [vmem:[#allocation11 + $0x38] sm:$0xf]
        %v652 = vld [vmem:[#allocation11 + $0x3c] sm:$0xf]
        %v653 = vld [vmem:[#allocation12] sm:$0x1]
        %v655 = vlaneseq
        %v656 = vshrl.u32 %v655, 7
        %v657 = vsub.s32 0, %v656
        %v658 = vrot.slane %v653, %v657
        %v676 = vunpack.c.l.b16 %v637
        %v677 = vunpack.c.l.b16 %v638
        %v678 = vunpack.c.l.b16 %v639
        %v679 = vunpack.c.l.b16 %v640
        %v680 = vunpack.c.l.b16 %v641
        %v681 = vunpack.c.l.b16 %v642
        %v682 = vunpack.c.l.b16 %v643
        %v683 = vunpack.c.l.b16 %v644
        %v684 = vunpack.c.l.b16 %v645
        %v685 = vunpack.c.l.b16 %v646
        %v686 = vunpack.c.l.b16 %v647
        %v687 = vunpack.c.l.b16 %v648
        %v688 = vunpack.c.l.b16 %v649
        %v689 = vunpack.c.l.b16 %v650
        %v690 = vunpack.c.l.b16 %v651
        %v691 = vunpack.c.l.b16 %v652
        %v692 = vpack.c.b16 %v677, %v676
        %v693 = vpack.c.b16 %v679, %v678
        %v694 = vpack.c.b16 %v681, %v680
        %v695 = vpack.c.b16 %v683, %v682
        %v696 = vpack.c.b16 %v685, %v684
        %v697 = vpack.c.b16 %v687, %v686
        %v698 = vpack.c.b16 %v689, %v688
        %v699 = vpack.c.b16 %v691, %v690
        %708 = vmatprep.subr.bf16.mxu0 0
        %709 = vmatpush1.bf16.msra.mxu0 %v692
        %710 = vmatprep.subr.bf16.mxu0 0
        %711 = vmatpush1.bf16.msra.mxu0 %v693
        %712 = vmatprep.subr.bf16.mxu0 0
        %713 = vmatpush1.bf16.msra.mxu0 %v694
        %714 = vmatprep.subr.bf16.mxu0 0
        %715 = vmatpush1.bf16.msra.mxu0 %v695
        %716 = vmatprep.subr.bf16.mxu0 0
        %717 = vmatpush1.bf16.msra.mxu0 %v696
        %718 = vmatprep.subr.bf16.mxu0 0
        %719 = vmatpush1.bf16.msra.mxu0 %v697
        %720 = vmatprep.subr.bf16.mxu0 0
        %721 = vmatpush1.bf16.msra.mxu0 %v698
        %722 = vmatprep.subr.bf16.mxu0 0
        %723 = vmatpush1.bf16.msra.mxu0 %v699
        %724 = vmatprep.subr.bf16.mxu0 0
        %725 = vmatpush1.bf16.msra.mxu0 0
        %726 = vmatprep.subr.bf16.mxu0 0
        %727 = vmatpush1.bf16.msra.mxu0 0
        %728 = vmatprep.subr.bf16.mxu0 0
        %729 = vmatpush1.bf16.msra.mxu0 0
        %730 = vmatprep.subr.bf16.mxu0 0
        %731 = vmatpush1.bf16.msra.mxu0 0
        %732 = vmatprep.subr.bf16.mxu0 0
        %733 = vmatpush1.bf16.msra.mxu0 0
        %734 = vmatprep.subr.bf16.mxu0 0
        %735 = vmatpush1.bf16.msra.mxu0 0
        %736 = vmatprep.subr.bf16.mxu0 0
        %737 = vmatpush1.bf16.msra.mxu0 0
        %738 = vmatprep.subr.bf16.mxu0 0
        %739 = vmatpush1.bf16.msra.mxu0 0
        %740 = vmatprep.mubr.bf16.mxu0 0
        %741 = vmatmul.mubr.bf16.gmra.mrb[0].mxu0 %v522
        %v742 = vpop.f32.mrb[0].mxu0
        %v743 = vadd.f32 %v658, %v742
        %v744 = vpop.f32.mrb[0].mxu0
        %v745 = vpop.f32.mrb[0].mxu0
        %v746 = vpop.f32.mrb[0].mxu0
        %747 = vdwg.mxu0
        %v748 = vld [vmem:[#allocation14] sm:$0xf]
        %v749 = vld [vmem:[#allocation14 + $0x4] sm:$0xf]
        %v750 = vld [vmem:[#allocation14 + $0x8] sm:$0xf]
        %v751 = vld [vmem:[#allocation14 + $0xc] sm:$0xf]
        %v752 = vld [vmem:[#allocation14 + $0x10] sm:$0xf]
        %v753 = vld [vmem:[#allocation14 + $0x14] sm:$0xf]
        %v754 = vld [vmem:[#allocation14 + $0x18] sm:$0xf]
        %v755 = vld [vmem:[#allocation14 + $0x1c] sm:$0xf]
        %v756 = vld [vmem:[#allocation14 + $0x20] sm:$0xf]
        %v757 = vld [vmem:[#allocation14 + $0x24] sm:$0xf]
        %v758 = vld [vmem:[#allocation14 + $0x28] sm:$0xf]
        %v759 = vld [vmem:[#allocation14 + $0x2c] sm:$0xf]
        %v760 = vld [vmem:[#allocation14 + $0x30] sm:$0xf]
        %v761 = vld [vmem:[#allocation14 + $0x34] sm:$0xf]
        %v762 = vld [vmem:[#allocation14 + $0x38] sm:$0xf]
        %v763 = vld [vmem:[#allocation14 + $0x3c] sm:$0xf]
        %v764 = vld [vmem:[#allocation15] sm:$0x1]
        %v766 = vlaneseq
        %v767 = vshrl.u32 %v766, 7
        %v768 = vsub.s32 0, %v767
        %v769 = vrot.slane %v764, %v768
        %v787 = vunpack.c.l.b16 %v748
        %v788 = vunpack.c.l.b16 %v749
        %v789 = vunpack.c.l.b16 %v750
        %v790 = vunpack.c.l.b16 %v751
        %v791 = vunpack.c.l.b16 %v752
        %v792 = vunpack.c.l.b16 %v753
        %v793 = vunpack.c.l.b16 %v754
        %v794 = vunpack.c.l.b16 %v755
        %v795 = vunpack.c.l.b16 %v756
        %v796 = vunpack.c.l.b16 %v757
        %v797 = vunpack.c.l.b16 %v758
        %v798 = vunpack.c.l.b16 %v759
        %v799 = vunpack.c.l.b16 %v760
        %v800 = vunpack.c.l.b16 %v761
        %v801 = vunpack.c.l.b16 %v762
        %v802 = vunpack.c.l.b16 %v763
        %v803 = vpack.c.b16 %v788, %v787
        %v804 = vpack.c.b16 %v790, %v789
        %v805 = vpack.c.b16 %v792, %v791
        %v806 = vpack.c.b16 %v794, %v793
        %v807 = vpack.c.b16 %v796, %v795
        %v808 = vpack.c.b16 %v798, %v797
        %v809 = vpack.c.b16 %v800, %v799
        %v810 = vpack.c.b16 %v802, %v801
        %819 = vmatprep.subr.bf16.mxu0 0
        %820 = vmatpush1.bf16.msra.mxu0 %v803
        %821 = vmatprep.subr.bf16.mxu0 0
        %822 = vmatpush1.bf16.msra.mxu0 %v804
        %823 = vmatprep.subr.bf16.mxu0 0
        %824 = vmatpush1.bf16.msra.mxu0 %v805
        %825 = vmatprep.subr.bf16.mxu0 0
        %826 = vmatpush1.bf16.msra.mxu0 %v806
        %827 = vmatprep.subr.bf16.mxu0 0
        %828 = vmatpush1.bf16.msra.mxu0 %v807
        %829 = vmatprep.subr.bf16.mxu0 0
        %830 = vmatpush1.bf16.msra.mxu0 %v808
        %831 = vmatprep.subr.bf16.mxu0 0
        %832 = vmatpush1.bf16.msra.mxu0 %v809
        %833 = vmatprep.subr.bf16.mxu0 0
        %834 = vmatpush1.bf16.msra.mxu0 %v810
        %835 = vmatprep.subr.bf16.mxu0 0
        %836 = vmatpush1.bf16.msra.mxu0 0
        %837 = vmatprep.subr.bf16.mxu0 0
        %838 = vmatpush1.bf16.msra.mxu0 0
        %839 = vmatprep.subr.bf16.mxu0 0
        %840 = vmatpush1.bf16.msra.mxu0 0
        %841 = vmatprep.subr.bf16.mxu0 0
        %842 = vmatpush1.bf16.msra.mxu0 0
        %843 = vmatprep.subr.bf16.mxu0 0
        %844 = vmatpush1.bf16.msra.mxu0 0
        %845 = vmatprep.subr.bf16.mxu0 0
        %846 = vmatpush1.bf16.msra.mxu0 0
        %847 = vmatprep.subr.bf16.mxu0 0
        %848 = vmatpush1.bf16.msra.mxu0 0
        %849 = vmatprep.subr.bf16.mxu0 0
        %850 = vmatpush1.bf16.msra.mxu0 0
        %851 = vmatprep.mubr.bf16.mxu0 0
        %852 = vmatmul.mubr.bf16.gmra.mrb[0].mxu0 %v522
        %v853 = vpop.f32.mrb[0].mxu0
        %v854 = vadd.f32 %v769, %v853
        %v855 = vpop.f32.mrb[0].mxu0
        %v856 = vpop.f32.mrb[0].mxu0
        %v857 = vpop.f32.mrb[0].mxu0
        %858 = vdwg.mxu0
        %v859 = vpack.c.bf16 %v636, %v636
        %v860 = vpack.c.bf16 %v743, %v743
        %v861 = vpack.c.bf16 %v854, %v854
        %vm862 = vcmask 31744
        %v864 = vsel %vm862, %v859, 0
        %v867 = vsel %vm862, %v860, 0
        %869 = vmatprep.subr.bf16.mxu0 0
        %870 = vmatpush1.bf16.xpose.msra.mxu0 %v867
        %871 = vmatprep.subr.bf16.mxu0 0
        %872 = vmatpush1.bf16.xpose.msra.mxu0 0
        %873 = vmatprep.subr.bf16.mxu0 0
        %874 = vmatpush1.bf16.xpose.msra.mxu0 0
        %875 = vmatprep.subr.bf16.mxu0 0
        %876 = vmatpush1.bf16.xpose.msra.mxu0 0
        %877 = vmatprep.subr.bf16.mxu0 0
        %878 = vmatpush1.bf16.xpose.msra.mxu0 0
        %879 = vmatprep.subr.bf16.mxu0 0
        %880 = vmatpush1.bf16.xpose.msra.mxu0 0
        %881 = vmatprep.subr.bf16.mxu0 0
        %882 = vmatpush1.bf16.xpose.msra.mxu0 0
        %883 = vmatprep.subr.bf16.mxu0 0
        %884 = vmatpush1.bf16.xpose.msra.mxu0 0
        %885 = vmatprep.subr.bf16.mxu0 0
        %886 = vmatpush1.bf16.xpose.msra.mxu0 0
        %887 = vmatprep.subr.bf16.mxu0 0
        %888 = vmatpush1.bf16.xpose.msra.mxu0 0
        %889 = vmatprep.subr.bf16.mxu0 0
        %890 = vmatpush1.bf16.xpose.msra.mxu0 0
        %891 = vmatprep.subr.bf16.mxu0 0
        %892 = vmatpush1.bf16.xpose.msra.mxu0 0
        %893 = vmatprep.subr.bf16.mxu0 0
        %894 = vmatpush1.bf16.xpose.msra.mxu0 0
        %895 = vmatprep.subr.bf16.mxu0 0
        %896 = vmatpush1.bf16.xpose.msra.mxu0 0
        %897 = vmatprep.subr.bf16.mxu0 0
        %898 = vmatpush1.bf16.xpose.msra.mxu0 0
        %899 = vmatprep.subr.bf16.mxu0 0
        %900 = vmatpush1.bf16.xpose.msra.mxu0 0
        %901 = vmatprep.mubr.bf16.mxu0 0
        %902 = vmatmul.mubr.bf16.gmra.mrb[0].mxu0 %v864
        %v903 = vpop.f32.mrb[0].mxu0
        %v904 = vadd.f32 0.0, %v903
        %v905 = vpop.f32.mrb[0].mxu0
        %v906 = vpop.f32.mrb[0].mxu0
        %v907 = vpop.f32.mrb[0].mxu0
        %908 = vdwg.mxu0
        %vm909 = vcmask 64512
        %v910 = vsel %vm909, %v904, -inf
        %911 = vmax.xlane.f32.xlu0 %v910
        %v912 = vpop.xlane.xlu0 %911
        %v913 = vsub.f32 %v904, %v912
        %v914 = vmul.f32 %v913, 1.442695
        %v915 = vpow.pop %v914
        %v916 = vsel %vm909, %v915, 0.0
        %917 = vadd.xlane.f32.xlu0 %v916
        %v918 = vpop.xlane.xlu0 %917
        %v919 = vpack.c.bf16 %v915, %v915
        %v921 = vsel %vm909, %v919, 0
        %vm923 = vcmask 1043456
        %v925 = vsel %vm923, %v861, 0
        %927 = vmatprep.subr.bf16.mxu0 0
        %928 = vmatpush1.bf16.msra.mxu0 %v925
        %929 = vmatprep.subr.bf16.mxu0 0
        %930 = vmatpush1.bf16.msra.mxu0 0
        %931 = vmatprep.subr.bf16.mxu0 0
        %932 = vmatpush1.bf16.msra.mxu0 0
        %933 = vmatprep.subr.bf16.mxu0 0
        %934 = vmatpush1.bf16.msra.mxu0 0
        %935 = vmatprep.subr.bf16.mxu0 0
        %936 = vmatpush1.bf16.msra.mxu0 0
        %937 = vmatprep.subr.bf16.mxu0 0
        %938 = vmatpush1.bf16.msra.mxu0 0
        %939 = vmatprep.subr.bf16.mxu0 0
        %940 = vmatpush1.bf16.msra.mxu0 0
        %941 = vmatprep.subr.bf16.mxu0 0
        %942 = vmatpush1.bf16.msra.mxu0 0
        %943 = vmatprep.subr.bf16.mxu0 0
        %944 = vmatpush1.bf16.msra.mxu0 0
        %945 = vmatprep.subr.bf16.mxu0 0
        %946 = vmatpush1.bf16.msra.mxu0 0
        %947 = vmatprep.subr.bf16.mxu0 0
        %948 = vmatpush1.bf16.msra.mxu0 0
        %949 = vmatprep.subr.bf16.mxu0 0
        %950 = vmatpush1.bf16.msra.mxu0 0
        %951 = vmatprep.subr.bf16.mxu0 0
        %952 = vmatpush1.bf16.msra.mxu0 0
        %953 = vmatprep.subr.bf16.mxu0 0
        %954 = vmatpush1.bf16.msra.mxu0 0
        %955 = vmatprep.subr.bf16.mxu0 0
        %956 = vmatpush1.bf16.msra.mxu0 0
        %957 = vmatprep.subr.bf16.mxu0 0
        %958 = vmatpush1.bf16.msra.mxu0 0
        %959 = vmatprep.mubr.bf16.mxu0 0
        %960 = vmatmul.mubr.bf16.gmra.mrb[0].mxu0 %v921
        %v961 = vpop.f32.mrb[0].mxu0
        %v962 = vadd.f32 0.0, %v961
        %v963 = vpop.f32.mrb[0].mxu0
        %v964 = vpop.f32.mrb[0].mxu0
        %v965 = vpop.f32.mrb[0].mxu0
        %966 = vdwg.mxu0
        %v967 = vrcp.pop %v918
        %v968 = vmul.f32 %v962, %v967
        %v969 = vpack.c.bf16 %v968, %v968
        %vm970 = vcmask 27648
        %971 = vst.msk [vmem:[#allocation2] sm:$0xf] %vm970, %v969
        %973 = vrot.lane.b32.xlu0 %v859, 124
        %v974 = vpop.permute.xlu0 %973
        %976 = vrot.lane.b32.xlu0 %v860, 124
        %v977 = vpop.permute.xlu0 %976
        %v979 = vsel %vm862, %v974, 0
        %v982 = vsel %vm862, %v977, 0
        %984 = vmatprep.subr.bf16.mxu0 0
        %985 = vmatpush1.bf16.xpose.msra.mxu0 %v982
        %986 = vmatprep.subr.bf16.mxu0 0
        %987 = vmatpush1.bf16.xpose.msra.mxu0 0
        %988 = vmatprep.subr.bf16.mxu0 0
        %989 = vmatpush1.bf16.xpose.msra.mxu0 0
        %990 = vmatprep.subr.bf16.mxu0 0
        %991 = vmatpush1.bf16.xpose.msra.mxu0 0
        %992 = vmatprep.subr.bf16.mxu0 0
        %993 = vmatpush1.bf16.xpose.msra.mxu0 0
        %994 = vmatprep.subr.bf16.mxu0 0
        %995 = vmatpush1.bf16.xpose.msra.mxu0 0
        %996 = vmatprep.subr.bf16.mxu0 0
        %997 = vmatpush1.bf16.xpose.msra.mxu0 0
        %998 = vmatprep.subr.bf16.mxu0 0
        %999 = vmatpush1.bf16.xpose.msra.mxu0 0
        %1000 = vmatprep.subr.bf16.mxu0 0
        %1001 = vmatpush1.bf16.xpose.msra.mxu0 0
        %1002 = vmatprep.subr.bf16.mxu0 0
        %1003 = vmatpush1.bf16.xpose.msra.mxu0 0
        %1004 = vmatprep.subr.bf16.mxu0 0
        %1005 = vmatpush1.bf16.xpose.msra.mxu0 0
        %1006 = vmatprep.subr.bf16.mxu0 0
        %1007 = vmatpush1.bf16.xpose.msra.mxu0 0
        %1008 = vmatprep.subr.bf16.mxu0 0
        %1009 = vmatpush1.bf16.xpose.msra.mxu0 0
        %1010 = vmatprep.subr.bf16.mxu0 0
        %1011 = vmatpush1.bf16.xpose.msra.mxu0 0
        %1012 = vmatprep.subr.bf16.mxu0 0
        %1013 = vmatpush1.bf16.xpose.msra.mxu0 0
        %1014 = vmatprep.subr.bf16.mxu0 0
        %1015 = vmatpush1.bf16.xpose.msra.mxu0 0
        %1016 = vmatprep.mubr.bf16.mxu0 0
        %1017 = vmatmul.mubr.bf16.gmra.mrb[0].mxu0 %v979
        %v1018 = vpop.f32.mrb[0].mxu0
        %v1019 = vadd.f32 0.0, %v1018
        %v1020 = vpop.f32.mrb[0].mxu0
        %v1021 = vpop.f32.mrb[0].mxu0
        %v1022 = vpop.f32.mrb[0].mxu0
        %1023 = vdwg.mxu0
        %v1024 = vsel %vm909, %v1019, -inf
        %1025 = vmax.xlane.f32.xlu0 %v1024
        %v1026 = vpop.xlane.xlu0 %1025
        %v1027 = vsub.f32 %v1019, %v1026
        %v1028 = vmul.f32 %v1027, 1.442695
        %v1029 = vpow.pop %v1028
        %v1030 = vsel %vm909, %v1029, 0.0
        %1031 = vadd.xlane.f32.xlu0 %v1030
        %v1032 = vpop.xlane.xlu0 %1031
        %v1033 = vpack.c.bf16 %v1029, %v1029
        %1035 = vrot.lane.b32.xlu0 %v861, 124
        %v1036 = vpop.permute.xlu0 %1035
        %v1038 = vsel %vm909, %v1033, 0
        %v1041 = vsel %vm923, %v1036, 0
        %1043 = vmatprep.subr.bf16.mxu0 0
        %1044 = vmatpush1.bf16.msra.mxu0 %v1041
        %1045 = vmatprep.subr.bf16.mxu0 0
        %1046 = vmatpush1.bf16.msra.mxu0 0
        %1047 = vmatprep.subr.bf16.mxu0 0
        %1048 = vmatpush1.bf16.msra.mxu0 0
        %1049 = vmatprep.subr.bf16.mxu0 0
        %1050 = vmatpush1.bf16.msra.mxu0 0
        %1051 = vmatprep.subr.bf16.mxu0 0
        %1052 = vmatpush1.bf16.msra.mxu0 0
        %1053 = vmatprep.subr.bf16.mxu0 0
        %1054 = vmatpush1.bf16.msra.mxu0 0
        %1055 = vmatprep.subr.bf16.mxu0 0
        %1056 = vmatpush1.bf16.msra.mxu0 0
        %1057 = vmatprep.subr.bf16.mxu0 0
        %1058 = vmatpush1.bf16.msra.mxu0 0
        %1059 = vmatprep.subr.bf16.mxu0 0
        %1060 = vmatpush1.bf16.msra.mxu0 0
        %1061 = vmatprep.subr.bf16.mxu0 0
        %1062 = vmatpush1.bf16.msra.mxu0 0
        %1063 = vmatprep.subr.bf16.mxu0 0
        %1064 = vmatpush1.bf16.msra.mxu0 0
        %1065 = vmatprep.subr.bf16.mxu0 0
        %1066 = vmatpush1.bf16.msra.mxu0 0
        %1067 = vmatprep.subr.bf16.mxu0 0
        %1068 = vmatpush1.bf16.msra.mxu0 0
        %1069 = vmatprep.subr.bf16.mxu0 0
        %1070 = vmatpush1.bf16.msra.mxu0 0
        %1071 = vmatprep.subr.bf16.mxu0 0
        %1072 = vmatpush1.bf16.msra.mxu0 0
        %1073 = vmatprep.subr.bf16.mxu0 0
        %1074 = vmatpush1.bf16.msra.mxu0 0
        %1075 = vmatprep.mubr.bf16.mxu0 0
        %1076 = vmatmul.mubr.bf16.gmra.mrb[0].mxu0 %v1038
        %v1077 = vpop.f32.mrb[0].mxu0
        %v1078 = vadd.f32 0.0, %v1077
        %v1079 = vpop.f32.mrb[0].mxu0
        %v1080 = vpop.f32.mrb[0].mxu0
        %v1081 = vpop.f32.mrb[0].mxu0
        %1082 = vdwg.mxu0
        %v1083 = vrcp.pop %v1032
        %v1084 = vmul.f32 %v1078, %v1083
        %v1085 = vpack.c.bf16 %v1084, %v1084
        %v1087 = vunpack.c.l.b16 %v1085
        %v1088 = vpack.c.b16 %v1087, %v1087
        %1089 = vrot.lane.b32.xlu0 %v1088, 4
        %v1090 = vpop.permute.xlu0 %1089
        %vm1092 = vcmask 60448
        %1093 = vst.msk [vmem:[#allocation2] sm:$0xf] %vm1092, %v1090
        %1094 = vrot.lane.b32.xlu0 %v859, 120
        %v1095 = vpop.permute.xlu0 %1094
        %1096 = vrot.lane.b32.xlu0 %v860, 120
        %v1097 = vpop.permute.xlu0 %1096
        %v1099 = vsel %vm862, %v1095, 0
        %v1102 = vsel %vm862, %v1097, 0
        %1104 = vmatprep.subr.bf16.mxu0 0
        %1105 = vmatpush1.bf16.xpose.msra.mxu0 %v1102
        %1106 = vmatprep.subr.bf16.mxu0 0
        %1107 = vmatpush1.bf16.xpose.msra.mxu0 0
        %1108 = vmatprep.subr.bf16.mxu0 0
        %1109 = vmatpush1.bf16.xpose.msra.mxu0 0
        %1110 = vmatprep.subr.bf16.mxu0 0
        %1111 = vmatpush1.bf16.xpose.msra.mxu0 0
        %1112 = vmatprep.subr.bf16.mxu0 0
        %1113 = vmatpush1.bf16.xpose.msra.mxu0 0
        %1114 = vmatprep.subr.bf16.mxu0 0
        %1115 = vmatpush1.bf16.xpose.msra.mxu0 0
        %1116 = vmatprep.subr.bf16.mxu0 0
        %1117 = vmatpush1.bf16.xpose.msra.mxu0 0
        %1118 = vmatprep.subr.bf16.mxu0 0
        %1119 = vmatpush1.bf16.xpose.msra.mxu0 0
        %1120 = vmatprep.subr.bf16.mxu0 0
        %1121 = vmatpush1.bf16.xpose.msra.mxu0 0
        %1122 = vmatprep.subr.bf16.mxu0 0
        %1123 = vmatpush1.bf16.xpose.msra.mxu0 0
        %1124 = vmatprep.subr.bf16.mxu0 0
        %1125 = vmatpush1.bf16.xpose.msra.mxu0 0
        %1126 = vmatprep.subr.bf16.mxu0 0
        %1127 = vmatpush1.bf16.xpose.msra.mxu0 0
        %1128 = vmatprep.subr.bf16.mxu0 0
        %1129 = vmatpush1.bf16.xpose.msra.mxu0 0
        %1130 = vmatprep.subr.bf16.mxu0 0
        %1131 = vmatpush1.bf16.xpose.msra.mxu0 0
        %1132 = vmatprep.subr.bf16.mxu0 0
        %1133 = vmatpush1.bf16.xpose.msra.mxu0 0
        %1134 = vmatprep.subr.bf16.mxu0 0
        %1135 = vmatpush1.bf16.xpose.msra.mxu0 0
        %1136 = vmatprep.mubr.bf16.mxu0 0
        %1137 = vmatmul.mubr.bf16.gmra.mrb[0].mxu0 %v1099
        %v1138 = vpop.f32.mrb[0].mxu0
        %v1139 = vadd.f32 0.0, %v1138
        %v1140 = vpop.f32.mrb[0].mxu0
        %v1141 = vpop.f32.mrb[0].mxu0
        %v1142 = vpop.f32.mrb[0].mxu0
        %1143 = vdwg.mxu0
        %v1144 = vsel %vm909, %v1139, -inf
        %1145 = vmax.xlane.f32.xlu0 %v1144
        %v1146 = vpop.xlane.xlu0 %1145
        %v1147 = vsub.f32 %v1139, %v1146
        %v1148 = vmul.f32 %v1147, 1.442695
        %v1149 = vpow.pop %v1148
        %v1150 = vsel %vm909, %v1149, 0.0
        %1151 = vadd.xlane.f32.xlu0 %v1150
        %v1152 = vpop.xlane.xlu0 %1151
        %v1153 = vpack.c.bf16 %v1149, %v1149
        %1154 = vrot.lane.b32.xlu0 %v861, 120
        %v1155 = vpop.permute.xlu0 %1154
        %v1157 = vsel %vm909, %v1153, 0
        %v1160 = vsel %vm923, %v1155, 0
        %1162 = vmatprep.subr.bf16.mxu0 0
        %1163 = vmatpush1.bf16.msra.mxu0 %v1160
        %1164 = vmatprep.subr.bf16.mxu0 0
        %1165 = vmatpush1.bf16.msra.mxu0 0
        %1166 = vmatprep.subr.bf16.mxu0 0
        %1167 = vmatpush1.bf16.msra.mxu0 0
        %1168 = vmatprep.subr.bf16.mxu0 0
        %1169 = vmatpush1.bf16.msra.mxu0 0
        %1170 = vmatprep.subr.bf16.mxu0 0
        %1171 = vmatpush1.bf16.msra.mxu0 0
        %1172 = vmatprep.subr.bf16.mxu0 0
        %1173 = vmatpush1.bf16.msra.mxu0 0
        %1174 = vmatprep.subr.bf16.mxu0 0
        %1175 = vmatpush1.bf16.msra.mxu0 0
        %1176 = vmatprep.subr.bf16.mxu0 0
        %1177 = vmatpush1.bf16.msra.mxu0 0
        %1178 = vmatprep.subr.bf16.mxu0 0
        %1179 = vmatpush1.bf16.msra.mxu0 0
        %1180 = vmatprep.subr.bf16.mxu0 0
        %1181 = vmatpush1.bf16.msra.mxu0 0
        %1182 = vmatprep.subr.bf16.mxu0 0
        %1183 = vmatpush1.bf16.msra.mxu0 0
        %1184 = vmatprep.subr.bf16.mxu0 0
        %1185 = vmatpush1.bf16.msra.mxu0 0
        %1186 = vmatprep.subr.bf16.mxu0 0
        %1187 = vmatpush1.bf16.msra.mxu0 0
        %1188 = vmatprep.subr.bf16.mxu0 0
        %1189 = vmatpush1.bf16.msra.mxu0 0
        %1190 = vmatprep.subr.bf16.mxu0 0
        %1191 = vmatpush1.bf16.msra.mxu0 0
        %1192 = vmatprep.subr.bf16.mxu0 0
        %1193 = vmatpush1.bf16.msra.mxu0 0
        %1194 = vmatprep.mubr.bf16.mxu0 0
        %1195 = vmatmul.mubr.bf16.gmra.mrb[0].mxu0 %v1157
        %v1196 = vpop.f32.mrb[0].mxu0
        %v1197 = vadd.f32 0.0, %v1196
        %v1198 = vpop.f32.mrb[0].mxu0
        %v1199 = vpop.f32.mrb[0].mxu0
        %v1200 = vpop.f32.mrb[0].mxu0
        %1201 = vdwg.mxu0
        %v1202 = vrcp.pop %v1152
        %v1203 = vmul.f32 %v1197, %v1202
        %v1204 = vpack.c.bf16 %v1203, %v1203
        %v1206 = vunpack.c.l.b16 %v1204
        %v1207 = vpack.c.b16 %v1206, %v1206
        %1208 = vrot.lane.b32.xlu0 %v1207, 8
        %v1209 = vpop.permute.xlu0 %1208
        %vm1211 = vcmask 93248
        %1212 = vst.msk [vmem:[#allocation2] sm:$0xf] %vm1211, %v1209
        %1213 = vrot.lane.b32.xlu0 %v859, 116
        %v1214 = vpop.permute.xlu0 %1213
        %1215 = vrot.lane.b32.xlu0 %v860, 116
        %v1216 = vpop.permute.xlu0 %1215
        %v1218 = vsel %vm862, %v1214, 0
        %v1221 = vsel %vm862, %v1216, 0
        %1223 = vmatprep.subr.bf16.mxu0 0
        %1224 = vmatpush1.bf16.xpose.msra.mxu0 %v1221
        %1225 = vmatprep.subr.bf16.mxu0 0
        %1226 = vmatpush1.bf16.xpose.msra.mxu0 0
        %1227 = vmatprep.subr.bf16.mxu0 0
        %1228 = vmatpush1.bf16.xpose.msra.mxu0 0
        %1229 = vmatprep.subr.bf16.mxu0 0
        %1230 = vmatpush1.bf16.xpose.msra.mxu0 0
        %1231 = vmatprep.subr.bf16.mxu0 0
        %1232 = vmatpush1.bf16.xpose.msra.mxu0 0
        %1233 = vmatprep.subr.bf16.mxu0 0
        %1234 = vmatpush1.bf16.xpose.msra.mxu0 0
        %1235 = vmatprep.subr.bf16.mxu0 0
        %1236 = vmatpush1.bf16.xpose.msra.mxu0 0
        %1237 = vmatprep.subr.bf16.mxu0 0
        %1238 = vmatpush1.bf16.xpose.msra.mxu0 0
        %1239 = vmatprep.subr.bf16.mxu0 0
        %1240 = vmatpush1.bf16.xpose.msra.mxu0 0
        %1241 = vmatprep.subr.bf16.mxu0 0
        %1242 = vmatpush1.bf16.xpose.msra.mxu0 0
        %1243 = vmatprep.subr.bf16.mxu0 0
        %1244 = vmatpush1.bf16.xpose.msra.mxu0 0
        %1245 = vmatprep.subr.bf16.mxu0 0
        %1246 = vmatpush1.bf16.xpose.msra.mxu0 0
        %1247 = vmatprep.subr.bf16.mxu0 0
        %1248 = vmatpush1.bf16.xpose.msra.mxu0 0
        %1249 = vmatprep.subr.bf16.mxu0 0
        %1250 = vmatpush1.bf16.xpose.msra.mxu0 0
        %1251 = vmatprep.subr.bf16.mxu0 0
        %1252 = vmatpush1.bf16.xpose.msra.mxu0 0
        %1253 = vmatprep.subr.bf16.mxu0 0
        %1254 = vmatpush1.bf16.xpose.msra.mxu0 0
        %1255 = vmatprep.mubr.bf16.mxu0 0
        %1256 = vmatmul.mubr.bf16.gmra.mrb[0].mxu0 %v1218
        %v1257 = vpop.f32.mrb[0].mxu0
        %v1258 = vadd.f32 0.0, %v1257
        %v1259 = vpop.f32.mrb[0].mxu0
        %v1260 = vpop.f32.mrb[0].mxu0
        %v1261 = vpop.f32.mrb[0].mxu0
        %1262 = vdwg.mxu0
        %v1263 = vsel %vm909, %v1258, -inf
        %1264 = vmax.xlane.f32.xlu0 %v1263
        %v1265 = vpop.xlane.xlu0 %1264
        %v1266 = vsub.f32 %v1258, %v1265
        %v1267 = vmul.f32 %v1266, 1.442695
        %v1268 = vpow.pop %v1267
        %v1269 = vsel %vm909, %v1268, 0.0
        %1270 = vadd.xlane.f32.xlu0 %v1269
        %v1271 = vpop.xlane.xlu0 %1270
        %v1272 = vpack.c.bf16 %v1268, %v1268
        %1273 = vrot.lane.b32.xlu0 %v861, 116
        %v1274 = vpop.permute.xlu0 %1273
        %v1276 = vsel %vm909, %v1272, 0
        %v1279 = vsel %vm923, %v1274, 0
        %1281 = vmatprep.subr.bf16.mxu0 0
        %1282 = vmatpush1.bf16.msra.mxu0 %v1279
        %1283 = vmatprep.subr.bf16.mxu0 0
        %1284 = vmatpush1.bf16.msra.mxu0 0
        %1285 = vmatprep.subr.bf16.mxu0 0
        %1286 = vmatpush1.bf16.msra.mxu0 0
        %1287 = vmatprep.subr.bf16.mxu0 0
        %1288 = vmatpush1.bf16.msra.mxu0 0
        %1289 = vmatprep.subr.bf16.mxu0 0
        %1290 = vmatpush1.bf16.msra.mxu0 0
        %1291 = vmatprep.subr.bf16.mxu0 0
        %1292 = vmatpush1.bf16.msra.mxu0 0
        %1293 = vmatprep.subr.bf16.mxu0 0
        %1294 = vmatpush1.bf16.msra.mxu0 0
        %1295 = vmatprep.subr.bf16.mxu0 0
        %1296 = vmatpush1.bf16.msra.mxu0 0
        %1297 = vmatprep.subr.bf16.mxu0 0
        %1298 = vmatpush1.bf16.msra.mxu0 0
        %1299 = vmatprep.subr.bf16.mxu0 0
        %1300 = vmatpush1.bf16.msra.mxu0 0
        %1301 = vmatprep.subr.bf16.mxu0 0
        %1302 = vmatpush1.bf16.msra.mxu0 0
        %1303 = vmatprep.subr.bf16.mxu0 0
        %1304 = vmatpush1.bf16.msra.mxu0 0
        %1305 = vmatprep.subr.bf16.mxu0 0
        %1306 = vmatpush1.bf16.msra.mxu0 0
        %1307 = vmatprep.subr.bf16.mxu0 0
        %1308 = vmatpush1.bf16.msra.mxu0 0
        %1309 = vmatprep.subr.bf16.mxu0 0
        %1310 = vmatpush1.bf16.msra.mxu0 0
        %1311 = vmatprep.subr.bf16.mxu0 0
        %1312 = vmatpush1.bf16.msra.mxu0 0
        %1313 = vmatprep.mubr.bf16.mxu0 0
        %1314 = vmatmul.mubr.bf16.gmra.mrb[0].mxu0 %v1276
        %v1315 = vpop.f32.mrb[0].mxu0
        %v1316 = vadd.f32 0.0, %v1315
        %v1317 = vpop.f32.mrb[0].mxu0
        %v1318 = vpop.f32.mrb[0].mxu0
        %v1319 = vpop.f32.mrb[0].mxu0
        %1320 = vdwg.mxu0
        %v1321 = vrcp.pop %v1271
        %v1322 = vmul.f32 %v1316, %v1321
        %v1323 = vpack.c.bf16 %v1322, %v1322
        %v1325 = vunpack.c.l.b16 %v1323
        %v1326 = vpack.c.b16 %v1325, %v1325
        %1327 = vrot.lane.b32.xlu0 %v1326, 12
        %v1328 = vpop.permute.xlu0 %1327
        %vm1330 = vcmask 126048
        %1331 = vst.msk [vmem:[#allocation2] sm:$0xf] %vm1330, %v1328
        %1332 = vrot.lane.b32.xlu0 %v859, 112
        %v1333 = vpop.permute.xlu0 %1332
        %1334 = vrot.lane.b32.xlu0 %v860, 112
        %v1335 = vpop.permute.xlu0 %1334
        %v1337 = vsel %vm862, %v1333, 0
        %v1340 = vsel %vm862, %v1335, 0
        %1342 = vmatprep.subr.bf16.mxu0 0
        %1343 = vmatpush1.bf16.xpose.msra.mxu0 %v1340
        %1344 = vmatprep.subr.bf16.mxu0 0
        %1345 = vmatpush1.bf16.xpose.msra.mxu0 0
        %1346 = vmatprep.subr.bf16.mxu0 0
        %1347 = vmatpush1.bf16.xpose.msra.mxu0 0
        %1348 = vmatprep.subr.bf16.mxu0 0
        %1349 = vmatpush1.bf16.xpose.msra.mxu0 0
        %1350 = vmatprep.subr.bf16.mxu0 0
        %1351 = vmatpush1.bf16.xpose.msra.mxu0 0
        %1352 = vmatprep.subr.bf16.mxu0 0
        %1353 = vmatpush1.bf16.xpose.msra.mxu0 0
        %1354 = vmatprep.subr.bf16.mxu0 0
        %1355 = vmatpush1.bf16.xpose.msra.mxu0 0
        %1356 = vmatprep.subr.bf16.mxu0 0
        %1357 = vmatpush1.bf16.xpose.msra.mxu0 0
        %1358 = vmatprep.subr.bf16.mxu0 0
        %1359 = vmatpush1.bf16.xpose.msra.mxu0 0
        %1360 = vmatprep.subr.bf16.mxu0 0
        %1361 = vmatpush1.bf16.xpose.msra.mxu0 0
        %1362 = vmatprep.subr.bf16.mxu0 0
        %1363 = vmatpush1.bf16.xpose.msra.mxu0 0
        %1364 = vmatprep.subr.bf16.mxu0 0
        %1365 = vmatpush1.bf16.xpose.msra.mxu0 0
        %1366 = vmatprep.subr.bf16.mxu0 0
        %1367 = vmatpush1.bf16.xpose.msra.mxu0 0
        %1368 = vmatprep.subr.bf16.mxu0 0
        %1369 = vmatpush1.bf16.xpose.msra.mxu0 0
        %1370 = vmatprep.subr.bf16.mxu0 0
        %1371 = vmatpush1.bf16.xpose.msra.mxu0 0
        %1372 = vmatprep.subr.bf16.mxu0 0
        %1373 = vmatpush1.bf16.xpose.msra.mxu0 0
        %1374 = vmatprep.mubr.bf16.mxu0 0
        %1375 = vmatmul.mubr.bf16.gmra.mrb[0].mxu0 %v1337
        %v1376 = vpop.f32.mrb[0].mxu0
        %v1377 = vadd.f32 0.0, %v1376
        %v1378 = vpop.f32.mrb[0].mxu0
        %v1379 = vpop.f32.mrb[0].mxu0
        %v1380 = vpop.f32.mrb[0].mxu0
        %1381 = vdwg.mxu0
        %v1382 = vsel %vm909, %v1377, -inf
        %1383 = vmax.xlane.f32.xlu0 %v1382
        %v1384 = vpop.xlane.xlu0 %1383
        %v1385 = vsub.f32 %v1377, %v1384
        %v1386 = vmul.f32 %v1385, 1.442695
        %v1387 = vpow.pop %v1386
        %v1388 = vsel %vm909, %v1387, 0.0
        %1389 = vadd.xlane.f32.xlu0 %v1388
        %v1390 = vpop.xlane.xlu0 %1389
        %v1391 = vpack.c.bf16 %v1387, %v1387
        %1392 = vrot.lane.b32.xlu0 %v861, 112
        %v1393 = vpop.permute.xlu0 %1392
        %v1395 = vsel %vm909, %v1391, 0
        %v1398 = vsel %vm923, %v1393, 0
        %1400 = vmatprep.subr.bf16.mxu0 0
        %1401 = vmatpush1.bf16.msra.mxu0 %v1398
        %1402 = vmatprep.subr.bf16.mxu0 0
        %1403 = vmatpush1.bf16.msra.mxu0 0
        %1404 = vmatprep.subr.bf16.mxu0 0
        %1405 = vmatpush1.bf16.msra.mxu0 0
        %1406 = vmatprep.subr.bf16.mxu0 0
        %1407 = vmatpush1.bf16.msra.mxu0 0
        %1408 = vmatprep.subr.bf16.mxu0 0
        %1409 = vmatpush1.bf16.msra.mxu0 0
        %1410 = vmatprep.subr.bf16.mxu0 0
        %1411 = vmatpush1.bf16.msra.mxu0 0
        %1412 = vmatprep.subr.bf16.mxu0 0
        %1413 = vmatpush1.bf16.msra.mxu0 0
        %1414 = vmatprep.subr.bf16.mxu0 0
        %1415 = vmatpush1.bf16.msra.mxu0 0
        %1416 = vmatprep.subr.bf16.mxu0 0
        %1417 = vmatpush1.bf16.msra.mxu0 0
        %1418 = vmatprep.subr.bf16.mxu0 0
        %1419 = vmatpush1.bf16.msra.mxu0 0
        %1420 = vmatprep.subr.bf16.mxu0 0
        %1421 = vmatpush1.bf16.msra.mxu0 0
        %1422 = vmatprep.subr.bf16.mxu0 0
        %1423 = vmatpush1.bf16.msra.mxu0 0
        %1424 = vmatprep.subr.bf16.mxu0 0
        %1425 = vmatpush1.bf16.msra.mxu0 0
        %1426 = vmatprep.subr.bf16.mxu0 0
        %1427 = vmatpush1.bf16.msra.mxu0 0
        %1428 = vmatprep.subr.bf16.mxu0 0
        %1429 = vmatpush1.bf16.msra.mxu0 0
        %1430 = vmatprep.subr.bf16.mxu0 0
        %1431 = vmatpush1.bf16.msra.mxu0 0
        %1432 = vmatprep.mubr.bf16.mxu0 0
        %1433 = vmatmul.mubr.bf16.gmra.mrb[0].mxu0 %v1395
        %v1434 = vpop.f32.mrb[0].mxu0
        %v1435 = vadd.f32 0.0, %v1434
        %v1436 = vpop.f32.mrb[0].mxu0
        %v1437 = vpop.f32.mrb[0].mxu0
        %v1438 = vpop.f32.mrb[0].mxu0
        %1439 = vdwg.mxu0
        %v1440 = vrcp.pop %v1390
        %v1441 = vmul.f32 %v1435, %v1440
        %v1442 = vpack.c.bf16 %v1441, %v1441
        %v1444 = vunpack.c.l.b16 %v1442
        %v1445 = vpack.c.b16 %v1444, %v1444
        %1446 = vrot.lane.b32.xlu0 %v1445, 16
        %v1447 = vpop.permute.xlu0 %1446
        %vm1449 = vcmask 158848
        %1450 = vst.msk [vmem:[#allocation2] sm:$0xf] %vm1449, %v1447
        %1451 = vrot.lane.b32.xlu0 %v859, 108
        %v1452 = vpop.permute.xlu0 %1451
        %1453 = vrot.lane.b32.xlu0 %v860, 108
        %v1454 = vpop.permute.xlu0 %1453
        %v1456 = vsel %vm862, %v1452, 0
        %v1459 = vsel %vm862, %v1454, 0
        %1461 = vmatprep.subr.bf16.mxu0 0
        %1462 = vmatpush1.bf16.xpose.msra.mxu0 %v1459
        %1463 = vmatprep.subr.bf16.mxu0 0
        %1464 = vmatpush1.bf16.xpose.msra.mxu0 0
        %1465 = vmatprep.subr.bf16.mxu0 0
        %1466 = vmatpush1.bf16.xpose.msra.mxu0 0
        %1467 = vmatprep.subr.bf16.mxu0 0
        %1468 = vmatpush1.bf16.xpose.msra.mxu0 0
        %1469 = vmatprep.subr.bf16.mxu0 0
        %1470 = vmatpush1.bf16.xpose.msra.mxu0 0
        %1471 = vmatprep.subr.bf16.mxu0 0
        %1472 = vmatpush1.bf16.xpose.msra.mxu0 0
        %1473 = vmatprep.subr.bf16.mxu0 0
        %1474 = vmatpush1.bf16.xpose.msra.mxu0 0
        %1475 = vmatprep.subr.bf16.mxu0 0
        %1476 = vmatpush1.bf16.xpose.msra.mxu0 0
        %1477 = vmatprep.subr.bf16.mxu0 0
        %1478 = vmatpush1.bf16.xpose.msra.mxu0 0
        %1479 = vmatprep.subr.bf16.mxu0 0
        %1480 = vmatpush1.bf16.xpose.msra.mxu0 0
        %1481 = vmatprep.subr.bf16.mxu0 0
        %1482 = vmatpush1.bf16.xpose.msra.mxu0 0
        %1483 = vmatprep.subr.bf16.mxu0 0
        %1484 = vmatpush1.bf16.xpose.msra.mxu0 0
        %1485 = vmatprep.subr.bf16.mxu0 0
        %1486 = vmatpush1.bf16.xpose.msra.mxu0 0
        %1487 = vmatprep.subr.bf16.mxu0 0
        %1488 = vmatpush1.bf16.xpose.msra.mxu0 0
        %1489 = vmatprep.subr.bf16.mxu0 0
        %1490 = vmatpush1.bf16.xpose.msra.mxu0 0
        %1491 = vmatprep.subr.bf16.mxu0 0
        %1492 = vmatpush1.bf16.xpose.msra.mxu0 0
        %1493 = vmatprep.mubr.bf16.mxu0 0
        %1494 = vmatmul.mubr.bf16.gmra.mrb[0].mxu0 %v1456
        %v1495 = vpop.f32.mrb[0].mxu0
        %v1496 = vadd.f32 0.0, %v1495
        %v1497 = vpop.f32.mrb[0].mxu0
        %v1498 = vpop.f32.mrb[0].mxu0
        %v1499 = vpop.f32.mrb[0].mxu0
        %1500 = vdwg.mxu0
        %v1501 = vsel %vm909, %v1496, -inf
        %1502 = vmax.xlane.f32.xlu0 %v1501
        %v1503 = vpop.xlane.xlu0 %1502
        %v1504 = vsub.f32 %v1496, %v1503
        %v1505 = vmul.f32 %v1504, 1.442695
        %v1506 = vpow.pop %v1505
        %v1507 = vsel %vm909, %v1506, 0.0
        %1508 = vadd.xlane.f32.xlu0 %v1507
        %v1509 = vpop.xlane.xlu0 %1508
        %v1510 = vpack.c.bf16 %v1506, %v1506
        %1511 = vrot.lane.b32.xlu0 %v861, 108
        %v1512 = vpop.permute.xlu0 %1511
        %v1514 = vsel %vm909, %v1510, 0
        %v1517 = vsel %vm923, %v1512, 0
        %1519 = vmatprep.subr.bf16.mxu0 0
        %1520 = vmatpush1.bf16.msra.mxu0 %v1517
        %1521 = vmatprep.subr.bf16.mxu0 0
        %1522 = vmatpush1.bf16.msra.mxu0 0
        %1523 = vmatprep.subr.bf16.mxu0 0
        %1524 = vmatpush1.bf16.msra.mxu0 0
        %1525 = vmatprep.subr.bf16.mxu0 0
        %1526 = vmatpush1.bf16.msra.mxu0 0
        %1527 = vmatprep.subr.bf16.mxu0 0
        %1528 = vmatpush1.bf16.msra.mxu0 0
        %1529 = vmatprep.subr.bf16.mxu0 0
        %1530 = vmatpush1.bf16.msra.mxu0 0
        %1531 = vmatprep.subr.bf16.mxu0 0
        %1532 = vmatpush1.bf16.msra.mxu0 0
        %1533 = vmatprep.subr.bf16.mxu0 0
        %1534 = vmatpush1.bf16.msra.mxu0 0
        %1535 = vmatprep.subr.bf16.mxu0 0
        %1536 = vmatpush1.bf16.msra.mxu0 0
        %1537 = vmatprep.subr.bf16.mxu0 0
        %1538 = vmatpush1.bf16.msra.mxu0 0
        %1539 = vmatprep.subr.bf16.mxu0 0
        %1540 = vmatpush1.bf16.msra.mxu0 0
        %1541 = vmatprep.subr.bf16.mxu0 0
        %1542 = vmatpush1.bf16.msra.mxu0 0
        %1543 = vmatprep.subr.bf16.mxu0 0
        %1544 = vmatpush1.bf16.msra.mxu0 0
        %1545 = vmatprep.subr.bf16.mxu0 0
        %1546 = vmatpush1.bf16.msra.mxu0 0
        %1547 = vmatprep.subr.bf16.mxu0 0
        %1548 = vmatpush1.bf16.msra.mxu0 0
        %1549 = vmatprep.subr.bf16.mxu0 0
        %1550 = vmatpush1.bf16.msra.mxu0 0
        %1551 = vmatprep.mubr.bf16.mxu0 0
        %1552 = vmatmul.mubr.bf16.gmra.mrb[0].mxu0 %v1514
        %v1553 = vpop.f32.mrb[0].mxu0
        %v1554 = vadd.f32 0.0, %v1553
        %v1555 = vpop.f32.mrb[0].mxu0
        %v1556 = vpop.f32.mrb[0].mxu0
        %v1557 = vpop.f32.mrb[0].mxu0
        %1558 = vdwg.mxu0
        %v1559 = vrcp.pop %v1509
        %v1560 = vmul.f32 %v1554, %v1559
        %v1561 = vpack.c.bf16 %v1560, %v1560
        %v1563 = vunpack.c.l.b16 %v1561
        %v1564 = vpack.c.b16 %v1563, %v1563
        %1565 = vrot.lane.b32.xlu0 %v1564, 20
        %v1566 = vpop.permute.xlu0 %1565
        %vm1568 = vcmask 191648
        %1569 = vst.msk [vmem:[#allocation2] sm:$0xf] %vm1568, %v1566
        %1570 = vrot.lane.b32.xlu0 %v859, 104
        %v1571 = vpop.permute.xlu0 %1570
        %1572 = vrot.lane.b32.xlu0 %v860, 104
        %v1573 = vpop.permute.xlu0 %1572
        %v1575 = vsel %vm862, %v1571, 0
        %v1578 = vsel %vm862, %v1573, 0
        %1580 = vmatprep.subr.bf16.mxu0 0
        %1581 = vmatpush1.bf16.xpose.msra.mxu0 %v1578
        %1582 = vmatprep.subr.bf16.mxu0 0
        %1583 = vmatpush1.bf16.xpose.msra.mxu0 0
        %1584 = vmatprep.subr.bf16.mxu0 0
        %1585 = vmatpush1.bf16.xpose.msra.mxu0 0
        %1586 = vmatprep.subr.bf16.mxu0 0
        %1587 = vmatpush1.bf16.xpose.msra.mxu0 0
        %1588 = vmatprep.subr.bf16.mxu0 0
        %1589 = vmatpush1.bf16.xpose.msra.mxu0 0
        %1590 = vmatprep.subr.bf16.mxu0 0
        %1591 = vmatpush1.bf16.xpose.msra.mxu0 0
        %1592 = vmatprep.subr.bf16.mxu0 0
        %1593 = vmatpush1.bf16.xpose.msra.mxu0 0
        %1594 = vmatprep.subr.bf16.mxu0 0
        %1595 = vmatpush1.bf16.xpose.msra.mxu0 0
        %1596 = vmatprep.subr.bf16.mxu0 0
        %1597 = vmatpush1.bf16.xpose.msra.mxu0 0
        %1598 = vmatprep.subr.bf16.mxu0 0
        %1599 = vmatpush1.bf16.xpose.msra.mxu0 0
        %1600 = vmatprep.subr.bf16.mxu0 0
        %1601 = vmatpush1.bf16.xpose.msra.mxu0 0
        %1602 = vmatprep.subr.bf16.mxu0 0
        %1603 = vmatpush1.bf16.xpose.msra.mxu0 0
        %1604 = vmatprep.subr.bf16.mxu0 0
        %1605 = vmatpush1.bf16.xpose.msra.mxu0 0
        %1606 = vmatprep.subr.bf16.mxu0 0
        %1607 = vmatpush1.bf16.xpose.msra.mxu0 0
        %1608 = vmatprep.subr.bf16.mxu0 0
        %1609 = vmatpush1.bf16.xpose.msra.mxu0 0
        %1610 = vmatprep.subr.bf16.mxu0 0
        %1611 = vmatpush1.bf16.xpose.msra.mxu0 0
        %1612 = vmatprep.mubr.bf16.mxu0 0
        %1613 = vmatmul.mubr.bf16.gmra.mrb[0].mxu0 %v1575
        %v1614 = vpop.f32.mrb[0].mxu0
        %v1615 = vadd.f32 0.0, %v1614
        %v1616 = vpop.f32.mrb[0].mxu0
        %v1617 = vpop.f32.mrb[0].mxu0
        %v1618 = vpop.f32.mrb[0].mxu0
        %1619 = vdwg.mxu0
        %v1620 = vsel %vm909, %v1615, -inf
        %1621 = vmax.xlane.f32.xlu0 %v1620
        %v1622 = vpop.xlane.xlu0 %1621
        %v1623 = vsub.f32 %v1615, %v1622
        %v1624 = vmul.f32 %v1623, 1.442695
        %v1625 = vpow.pop %v1624
        %v1626 = vsel %vm909, %v1625, 0.0
        %1627 = vadd.xlane.f32.xlu0 %v1626
        %v1628 = vpop.xlane.xlu0 %1627
        %v1629 = vpack.c.bf16 %v1625, %v1625
        %1630 = vrot.lane.b32.xlu0 %v861, 104
        %v1631 = vpop.permute.xlu0 %1630
        %v1633 = vsel %vm909, %v1629, 0
        %v1636 = vsel %vm923, %v1631, 0
        %1638 = vmatprep.subr.bf16.mxu0 0
        %1639 = vmatpush1.bf16.msra.mxu0 %v1636
        %1640 = vmatprep.subr.bf16.mxu0 0
        %1641 = vmatpush1.bf16.msra.mxu0 0
        %1642 = vmatprep.subr.bf16.mxu0 0
        %1643 = vmatpush1.bf16.msra.mxu0 0
        %1644 = vmatprep.subr.bf16.mxu0 0
        %1645 = vmatpush1.bf16.msra.mxu0 0
        %1646 = vmatprep.subr.bf16.mxu0 0
        %1647 = vmatpush1.bf16.msra.mxu0 0
        %1648 = vmatprep.subr.bf16.mxu0 0
        %1649 = vmatpush1.bf16.msra.mxu0 0
        %1650 = vmatprep.subr.bf16.mxu0 0
        %1651 = vmatpush1.bf16.msra.mxu0 0
        %1652 = vmatprep.subr.bf16.mxu0 0
        %1653 = vmatpush1.bf16.msra.mxu0 0
        %1654 = vmatprep.subr.bf16.mxu0 0
        %1655 = vmatpush1.bf16.msra.mxu0 0
        %1656 = vmatprep.subr.bf16.mxu0 0
        %1657 = vmatpush1.bf16.msra.mxu0 0
        %1658 = vmatprep.subr.bf16.mxu0 0
        %1659 = vmatpush1.bf16.msra.mxu0 0
        %1660 = vmatprep.subr.bf16.mxu0 0
        %1661 = vmatpush1.bf16.msra.mxu0 0
        %1662 = vmatprep.subr.bf16.mxu0 0
        %1663 = vmatpush1.bf16.msra.mxu0 0
        %1664 = vmatprep.subr.bf16.mxu0 0
        %1665 = vmatpush1.bf16.msra.mxu0 0
        %1666 = vmatprep.subr.bf16.mxu0 0
        %1667 = vmatpush1.bf16.msra.mxu0 0
        %1668 = vmatprep.subr.bf16.mxu0 0
        %1669 = vmatpush1.bf16.msra.mxu0 0
        %1670 = vmatprep.mubr.bf16.mxu0 0
        %1671 = vmatmul.mubr.bf16.gmra.mrb[0].mxu0 %v1633
        %v1672 = vpop.f32.mrb[0].mxu0
        %v1673 = vadd.f32 0.0, %v1672
        %v1674 = vpop.f32.mrb[0].mxu0
        %v1675 = vpop.f32.mrb[0].mxu0
        %v1676 = vpop.f32.mrb[0].mxu0
        %1677 = vdwg.mxu0
        %v1678 = vrcp.pop %v1628
        %v1679 = vmul.f32 %v1673, %v1678
        %v1680 = vpack.c.bf16 %v1679, %v1679
        %v1682 = vunpack.c.l.b16 %v1680
        %v1683 = vpack.c.b16 %v1682, %v1682
        %1684 = vrot.lane.b32.xlu0 %v1683, 24
        %v1685 = vpop.permute.xlu0 %1684
        %vm1687 = vcmask 224448
        %1688 = vst.msk [vmem:[#allocation2] sm:$0xf] %vm1687, %v1685
        %1689 = vrot.lane.b32.xlu0 %v859, 100
        %v1690 = vpop.permute.xlu0 %1689
        %1691 = vrot.lane.b32.xlu0 %v860, 100
        %v1692 = vpop.permute.xlu0 %1691
        %v1694 = vsel %vm862, %v1690, 0
        %v1697 = vsel %vm862, %v1692, 0
        %1699 = vmatprep.subr.bf16.mxu0 0
        %1700 = vmatpush1.bf16.xpose.msra.mxu0 %v1697
        %1701 = vmatprep.subr.bf16.mxu0 0
        %1702 = vmatpush1.bf16.xpose.msra.mxu0 0
        %1703 = vmatprep.subr.bf16.mxu0 0
        %1704 = vmatpush1.bf16.xpose.msra.mxu0 0
        %1705 = vmatprep.subr.bf16.mxu0 0
        %1706 = vmatpush1.bf16.xpose.msra.mxu0 0
        %1707 = vmatprep.subr.bf16.mxu0 0
        %1708 = vmatpush1.bf16.xpose.msra.mxu0 0
        %1709 = vmatprep.subr.bf16.mxu0 0
        %1710 = vmatpush1.bf16.xpose.msra.mxu0 0
        %1711 = vmatprep.subr.bf16.mxu0 0
        %1712 = vmatpush1.bf16.xpose.msra.mxu0 0
        %1713 = vmatprep.subr.bf16.mxu0 0
        %1714 = vmatpush1.bf16.xpose.msra.mxu0 0
        %1715 = vmatprep.subr.bf16.mxu0 0
        %1716 = vmatpush1.bf16.xpose.msra.mxu0 0
        %1717 = vmatprep.subr.bf16.mxu0 0
        %1718 = vmatpush1.bf16.xpose.msra.mxu0 0
        %1719 = vmatprep.subr.bf16.mxu0 0
        %1720 = vmatpush1.bf16.xpose.msra.mxu0 0
        %1721 = vmatprep.subr.bf16.mxu0 0
        %1722 = vmatpush1.bf16.xpose.msra.mxu0 0
        %1723 = vmatprep.subr.bf16.mxu0 0
        %1724 = vmatpush1.bf16.xpose.msra.mxu0 0
        %1725 = vmatprep.subr.bf16.mxu0 0
        %1726 = vmatpush1.bf16.xpose.msra.mxu0 0
        %1727 = vmatprep.subr.bf16.mxu0 0
        %1728 = vmatpush1.bf16.xpose.msra.mxu0 0
        %1729 = vmatprep.subr.bf16.mxu0 0
        %1730 = vmatpush1.bf16.xpose.msra.mxu0 0
        %1731 = vmatprep.mubr.bf16.mxu0 0
        %1732 = vmatmul.mubr.bf16.gmra.mrb[0].mxu0 %v1694
        %v1733 = vpop.f32.mrb[0].mxu0
        %v1734 = vadd.f32 0.0, %v1733
        %v1735 = vpop.f32.mrb[0].mxu0
        %v1736 = vpop.f32.mrb[0].mxu0
        %v1737 = vpop.f32.mrb[0].mxu0
        %1738 = vdwg.mxu0
        %v1739 = vsel %vm909, %v1734, -inf
        %1740 = vmax.xlane.f32.xlu0 %v1739
        %v1741 = vpop.xlane.xlu0 %1740
        %v1742 = vsub.f32 %v1734, %v1741
        %v1743 = vmul.f32 %v1742, 1.442695
        %v1744 = vpow.pop %v1743
        %v1745 = vsel %vm909, %v1744, 0.0
        %1746 = vadd.xlane.f32.xlu0 %v1745
        %v1747 = vpop.xlane.xlu0 %1746
        %v1748 = vpack.c.bf16 %v1744, %v1744
        %1749 = vrot.lane.b32.xlu0 %v861, 100
        %v1750 = vpop.permute.xlu0 %1749
        %v1752 = vsel %vm909, %v1748, 0
        %v1755 = vsel %vm923, %v1750, 0
        %1757 = vmatprep.subr.bf16.mxu0 0
        %1758 = vmatpush1.bf16.msra.mxu0 %v1755
        %1759 = vmatprep.subr.bf16.mxu0 0
        %1760 = vmatpush1.bf16.msra.mxu0 0
        %1761 = vmatprep.subr.bf16.mxu0 0
        %1762 = vmatpush1.bf16.msra.mxu0 0
        %1763 = vmatprep.subr.bf16.mxu0 0
        %1764 = vmatpush1.bf16.msra.mxu0 0
        %1765 = vmatprep.subr.bf16.mxu0 0
        %1766 = vmatpush1.bf16.msra.mxu0 0
        %1767 = vmatprep.subr.bf16.mxu0 0
        %1768 = vmatpush1.bf16.msra.mxu0 0
        %1769 = vmatprep.subr.bf16.mxu0 0
        %1770 = vmatpush1.bf16.msra.mxu0 0
        %1771 = vmatprep.subr.bf16.mxu0 0
        %1772 = vmatpush1.bf16.msra.mxu0 0
        %1773 = vmatprep.subr.bf16.mxu0 0
        %1774 = vmatpush1.bf16.msra.mxu0 0
        %1775 = vmatprep.subr.bf16.mxu0 0
        %1776 = vmatpush1.bf16.msra.mxu0 0
        %1777 = vmatprep.subr.bf16.mxu0 0
        %1778 = vmatpush1.bf16.msra.mxu0 0
        %1779 = vmatprep.subr.bf16.mxu0 0
        %1780 = vmatpush1.bf16.msra.mxu0 0
        %1781 = vmatprep.subr.bf16.mxu0 0
        %1782 = vmatpush1.bf16.msra.mxu0 0
        %1783 = vmatprep.subr.bf16.mxu0 0
        %1784 = vmatpush1.bf16.msra.mxu0 0
        %1785 = vmatprep.subr.bf16.mxu0 0
        %1786 = vmatpush1.bf16.msra.mxu0 0
        %1787 = vmatprep.subr.bf16.mxu0 0
        %1788 = vmatpush1.bf16.msra.mxu0 0
        %1789 = vmatprep.mubr.bf16.mxu0 0
        %1790 = vmatmul.mubr.bf16.gmra.mrb[0].mxu0 %v1752
        %v1791 = vpop.f32.mrb[0].mxu0
        %v1792 = vadd.f32 0.0, %v1791
        %v1793 = vpop.f32.mrb[0].mxu0
        %v1794 = vpop.f32.mrb[0].mxu0
        %v1795 = vpop.f32.mrb[0].mxu0
        %1796 = vdwg.mxu0
        %v1797 = vrcp.pop %v1747
        %v1798 = vmul.f32 %v1792, %v1797
        %v1799 = vpack.c.bf16 %v1798, %v1798
        %v1801 = vunpack.c.l.b16 %v1799
        %v1802 = vpack.c.b16 %v1801, %v1801
        %1803 = vrot.lane.b32.xlu0 %v1802, 28
        %v1804 = vpop.permute.xlu0 %1803
        %vm1806 = vcmask 257248
        %1807 = vst.msk [vmem:[#allocation2] sm:$0xf] %vm1806, %v1804
        %v1808 = vld [vmem:[#allocation2] sm:$0xf]
        %v1809 = vld [vmem:[#allocation17] sm:$0xf]
        %v1810 = vld [vmem:[#allocation17 + $0x4] sm:$0xf]
        %v1811 = vld [vmem:[#allocation17 + $0x8] sm:$0xf]
        %v1812 = vld [vmem:[#allocation17 + $0xc] sm:$0xf]
        %v1813 = vld [vmem:[#allocation18] sm:$0x1]
        %v1815 = vlaneseq
        %v1816 = vshrl.u32 %v1815, 7
        %v1817 = vsub.s32 0, %v1816
        %v1818 = vrot.slane %v1813, %v1817
        %v1824 = vunpack.c.l.b16 %v1809
        %v1825 = vunpack.c.l.b16 %v1810
        %v1826 = vunpack.c.l.b16 %v1811
        %v1827 = vunpack.c.l.b16 %v1812
        %v1828 = vpack.c.b16 %v1825, %v1824
        %v1829 = vpack.c.b16 %v1827, %v1826
        %vm1832 = vcmask 261120
        %v1834 = vsel %vm1832, %v1808, 0
        %1836 = vmatprep.subr.bf16.mxu0 0
        %1837 = vmatpush1.bf16.msra.mxu0 %v1828
        %1838 = vmatprep.subr.bf16.mxu0 0
        %1839 = vmatpush1.bf16.msra.mxu0 %v1829
        %1840 = vmatprep.subr.bf16.mxu0 0
        %1841 = vmatpush1.bf16.msra.mxu0 0
        %1842 = vmatprep.subr.bf16.mxu0 0
        %1843 = vmatpush1.bf16.msra.mxu0 0
        %1844 = vmatprep.subr.bf16.mxu0 0
        %1845 = vmatpush1.bf16.msra.mxu0 0
        %1846 = vmatprep.subr.bf16.mxu0 0
        %1847 = vmatpush1.bf16.msra.mxu0 0
        %1848 = vmatprep.subr.bf16.mxu0 0
        %1849 = vmatpush1.bf16.msra.mxu0 0
        %1850 = vmatprep.subr.bf16.mxu0 0
        %1851 = vmatpush1.bf16.msra.mxu0 0
        %1852 = vmatprep.subr.bf16.mxu0 0
        %1853 = vmatpush1.bf16.msra.mxu0 0
        %1854 = vmatprep.subr.bf16.mxu0 0
        %1855 = vmatpush1.bf16.msra.mxu0 0
        %1856 = vmatprep.subr.bf16.mxu0 0
        %1857 = vmatpush1.bf16.msra.mxu0 0
        %1858 = vmatprep.subr.bf16.mxu0 0
        %1859 = vmatpush1.bf16.msra.mxu0 0
        %1860 = vmatprep.subr.bf16.mxu0 0
        %1861 = vmatpush1.bf16.msra.mxu0 0
        %1862 = vmatprep.subr.bf16.mxu0 0
        %1863 = vmatpush1.bf16.msra.mxu0 0
        %1864 = vmatprep.subr.bf16.mxu0 0
        %1865 = vmatpush1.bf16.msra.mxu0 0
        %1866 = vmatprep.subr.bf16.mxu0 0
        %1867 = vmatpush1.bf16.msra.mxu0 0
        %1868 = vmatprep.mubr.bf16.mxu0 0
        %1869 = vmatmul.mubr.bf16.gmra.mrb[0].mxu0 %v1834
        %v1870 = vpop.f32.mrb[0].mxu0
        %v1871 = vadd.f32 %v1818, %v1870
        %v1872 = vpop.f32.mrb[0].mxu0
        %v1873 = vpop.f32.mrb[0].mxu0
        %v1874 = vpop.f32.mrb[0].mxu0
        %1875 = vdwg.mxu0
        %vm1876 = vcmp.gt.f32.partialorder %v1871, 0.0
        %v1877 = vmul.f32 %v1871, 0.01
        %v1878 = vsel %vm1876, %v1871, %v1877
        %1879 = vst [vmem:[%s519] sm:$0xff] %v1878
        %s1880 = sand.u32 %s262, 1
        %s1881 = scalar_lea.sflag [#allocation5], %s1880
        %s1882 = sand.u32 %s262, 1
        %s1883 = smul.addr %s1882, 8
        %s1884 = scalar_lea.vmem [#allocation20], %s1883
        // Predicated region
        $region101: #{tpu_custom_call.1} parent=59 // pred_check
          %p1885 = pneg %p272
        $region102: #{tpu_custom_call.1} parent=59 // pred_check_branch
          %1887 = sbr.rel (%p1885) target = $region104
        $region103: #{tpu_custom_call.1} parent=59 // pred_region
          %s1889 = ssub.s32 128, 128
          %1890 = vsyncadd %s1881, %s1889
          %s1891 = smul.addr %s34, 128
          %s1892 = scalar_lea.hbm %s10, %s1891
          %s1894 = sshll.u32 %s1884, 4
          %s1895 = int_to_ptr.vmem [resolvable:$true] %s1894
          %1897 = dma.vmem_to_hbm [thread:$0]  %s1895, 128, %s1892, %s1881
        $region104: #{tpu_custom_call.1} parent=59 // pred_fallthru
          _
      $region60: #{tpu_custom_call.1} parent=5 // pred_fallthru
        _
      %p1898 = scmp.le.s32.totalorder 2, %s29
      // Predicated region
      $region105: #{tpu_custom_call.1} parent=5 // pred_check
        %p1899 = pneg %p1898
      $region106: #{tpu_custom_call.1} parent=5 // pred_check_branch
        %1901 = sbr.rel (%p1899) target = $region108
      $region107: #{tpu_custom_call.1} parent=5 // pred_region
        %s1902 = ssub.s32 %s29, 2
        // Predicated region
        $region109: #{tpu_custom_call.1} parent=107 // pred_check
          %p1903 = pneg %p278
        $region110: #{tpu_custom_call.1} parent=107 // pred_check_branch
          %1905 = sbr.rel (%p1903) target = $region112
        $region111: #{tpu_custom_call.1} parent=107 // pred_region
          %s1906 = sand.u32 %s263, 1
          %s1907 = scalar_lea.sflag [#allocation5], %s1906
          %s1908 = sand.u32 %s263, 1
          %s1909 = smul.addr %s1908, 8
          %s1910 = scalar_lea.vmem [#allocation20], %s1909
          %1911 = dma.done %s1907, 128
        $region112: #{tpu_custom_call.1} parent=107 // pred_fallthru
          _
      $region108: #{tpu_custom_call.1} parent=5 // pred_fallthru
        _
    $region6: #{tpu_custom_call.1} parent=1 // loop_footer
      %s33 = sadd.s32 1, %s29
    $region7: #{tpu_custom_call.1} parent=1 // loop_footer_branch
      %28 = sbr.rel target = $region3
    $region8: #{tpu_custom_call.1} parent=1 // loop_exit
      _
    %1912 = vsyncpa [#allocation4], 1
    %s1913 = scalar_lea.sflag [#allocation4], 1
    %1914 = vsyncpa %s1913, 1
    %1915 = vsyncpa [#allocation7], 1
    %s1916 = scalar_lea.sflag [#allocation7], 1
    %1917 = vsyncpa %s1916, 1
    %1918 = vsyncpa [#allocation10], 1
    %1919 = vsyncpa [#allocation13], 1
    %1920 = vsyncpa [#allocation16], 1
    %1921 = vsyncpa [#allocation19], 1
    %1922 = vsyncpa [#allocation5], 1
    %s1923 = scalar_lea.sflag [#allocation5], 1
    %1924 = vsyncpa %s1923, 1

</llo_original>
